<compile_context>
chip_gen: v6e
topology: v6e:2x2x1
jax: 0.10.0
libtpu: 0.0.40
codegen_flags: <defaults>
</compile_context>

<pallas_src>
import math

import jax
import jax.numpy as jnp
import numpy as np
from jax.experimental import pallas as pl
from jax.experimental.pallas import tpu as pltpu

_LANE = 128
_SUBLANE = 8
_TB_UNIT = 16          # batch-tile granularity (bf16 sublane packing)
_NEG_BIG = -1e30       # bias for padded class columns -> softmax prob exactly 0


def _round_up(x, m):
    return (x + m - 1) // m * m


def _tpu_vmem_capacity():
    """Per-TensorCore VMEM bytes; conservative default if the query fails."""
    try:
        info = pltpu.get_tpu_info()
        cap = getattr(info, "vmem_capacity_bytes", None)
        if cap:
            return int(cap)
    except Exception:
        pass
    return 64 << 20    # smallest current generation (v7x per-TC VMEM)


def _single_buffer_supported():
    """True if pl.BlockSpec accepts pipeline_mode=pl.Buffered(1)."""
    try:
        pl.BlockSpec((8, 128), lambda i: (0, 0), pipeline_mode=pl.Buffered(1))
        return True
    except Exception:
        return False


def _make_finetuner_kernel(num_layers, inv_hw):
    inv_sqrt2 = 1.0 / math.sqrt(2.0)

    def kernel(x_ref, wv_ref, bv_ref, *rest):
        layer_refs = rest[:-1]
        out_ref = rest[-1]

        # Stand-in ViT CLS extractor: spatial mean-pool (f32 accumulation) and
        # a single (C_pad, D_pad) projection on the MXU.  No HW-folded weight.
        xb = x_ref[...].astype(jnp.float32)              # (TB, C_pad, HW_pad)
        pooled = jnp.sum(xb, axis=-1) * inv_hw           # (TB, C_pad)
        y = jnp.dot(pooled, wv_ref[...],
                    preferred_element_type=jnp.float32) + bv_ref[...]

        # Classification head: Linear -> GELU -> ... -> Linear.
        for i in range(num_layers):
            w = layer_refs[2 * i][...]
            b = layer_refs[2 * i + 1][...]
            y = jnp.dot(y, w, preferred_element_type=jnp.float32) + b
            if i != num_layers - 1:
                # exact erf GELU (matches torch.nn.GELU default)
                y = 0.5 * y * (1.0 + jax.lax.erf(y * inv_sqrt2))

        # Softmax over classes.  Padded class logits are -1e30 -> exp underflows
        # to exactly 0.  Exact f32 divide so rows sum to 1 to f32 precision.
        m = jnp.max(y, axis=1, keepdims=True)
        e = jnp.exp(y - m)
        s = jnp.sum(e, axis=1, keepdims=True)
        out_ref[...] = (e / s).astype(out_ref.dtype)

    return kernel


def finetuner_forward(x, vit_params, layer_params, *, x_dtype=jnp.bfloat16):
    """x: (B, C, H, W); vit_params: (w_vit (C, D), b_vit (D,));
    layer_params: list of (w (in, out), b (out,)).  Returns (B, n_classes)."""
    w_vit, b_vit = vit_params
    B, C, H, W = x.shape
    HW = H * W
    D = w_vit.shape[1]
    num_layers = len(layer_params)
    n_classes = layer_params[-1][0].shape[1]

    # ---- pad feature dims to TPU-friendly sizes (semantics preserved) -------
    C_pad = _round_up(C, _SUBLANE)
    HW_pad = _round_up(HW, _LANE)
    D_pad = _round_up(D, _LANE)

    w_vit_p = jnp.pad(w_vit.astype(jnp.float32),
                      ((0, C_pad - C), (0, D_pad - D)))
    b_vit_p = jnp.pad(b_vit.astype(jnp.float32),
                      (0, D_pad - D)).reshape(1, D_pad)

    padded_layers = []
    in_dim = D_pad
    for i, (w, b) in enumerate(layer_params):
        fin, fout = w.shape
        fout_pad = _round_up(fout, _LANE)
        w_p = jnp.pad(w.astype(jnp.float32),
                      ((0, in_dim - fin), (0, fout_pad - fout)))
        if i == num_layers - 1:
            # padded class columns get a huge negative bias -> zero probability
            b_p = jnp.pad(b.astype(jnp.float32), (0, fout_pad - fout),
                          constant_values=_NEG_BIG)
        else:
            b_p = jnp.pad(b.astype(jnp.float32), (0, fout_pad - fout))
        padded_layers.append((w_p, b_p.reshape(1, fout_pad)))
        in_dim = fout_pad
    NC_pad = in_dim

    const_arrays = [w_vit_p, b_vit_p]
    for w, b in padded_layers:
        const_arrays += [w, b]
    weight_bytes = sum(int(a.size) * a.dtype.itemsize for a in const_arrays)

    # ---- generation-aware batch tiling ---------------------------------------
    vmem_cap = _tpu_vmem_capacity()
    small_vmem = vmem_cap <= (96 << 20)     # v7x: 64 MiB / TC, 2 TensorCores
    tb_cap = 256 if small_vmem else 512     # v5e/v6e (128 MiB): bigger tiles

    TB = min(tb_cap, _round_up(B, _TB_UNIT))
    if small_vmem and B > _TB_UNIT:
        # keep >= 2 grid steps so the "parallel" axis can feed both TensorCores
        TB = min(TB, _round_up(pl.cdiv(B, 2), _TB_UNIT))

    single_buf = _single_buffer_supported()
    wmult = 1 if single_buf else 2
    x_itemsize = jnp.dtype(x_dtype).itemsize

    def _vmem_need(tb):
        x_tile = tb * C_pad * HW_pad * x_itemsize   # double-buffered input tile
        o_tile = tb * NC_pad * 4                    # double-buffered output tile
        return 2 * (x_tile + o_tile) + wmult * weight_bytes

    budget = vmem_cap - (12 << 20)                  # compiler-scratch headroom
    while TB > _TB_UNIT and _vmem_need(TB) > budget:
        TB = max(_TB_UNIT, _round_up(TB // 2, _TB_UNIT))
    # NOTE: very large heads (e.g. D=768 / hidden=3072 on v7x) would additionally
    # need an 'arbitrary' K grid axis + f32 accumulator; not needed at these sizes.

    B_pad = _round_up(B, TB)
    grid = (B_pad // TB,)

    # ---- bf16 input stream, lane-dense (B, C_pad, HW_pad) --------------------
    x3 = x.reshape(B, C, HW).astype(x_dtype)
    x3 = jnp.pad(x3, ((0, B_pad - B), (0, C_pad - C), (0, HW_pad - HW)))

    vmem_limit = int(min(vmem_cap - (8 << 20),
                         max(32 << 20, _vmem_need(TB) + weight_bytes + (8 << 20))))

    # ---- advisory cost estimate ----------------------------------------------
    layer_dims = [(w.shape[0], w.shape[1]) for w, _ in padded_layers]
    flops = (B_pad * C_pad * HW_pad                      # mean-pool adds
             + 2 * B_pad * C_pad * D_pad                 # ViT projection
             + 2 * B_pad * sum(a * b for a, b in layer_dims)
             + 6 * B_pad * sum(b for _, b in layer_dims[:-1]))   # GELU (approx)
    transcendentals = B_pad * (sum(b for _, b in layer_dims[:-1]) + NC_pad)
    bytes_accessed = (int(x3.size) * x_itemsize + weight_bytes
                      + B_pad * NC_pad * 4)

    kernel = _make_finetuner_kernel(num_layers, 1.0 / float(HW))

    def _run(use_single_buffer):
        in_specs = [pl.BlockSpec((TB, C_pad, HW_pad), lambda i: (i, 0, 0))]
        for a in const_arrays:
            if use_single_buffer:
                # constant across grid steps -> no need to double-buffer
                in_specs.append(pl.BlockSpec(a.shape, lambda i: (0, 0),
                                             pipeline_mode=pl.Buffered(1)))
            else:
                in_specs.append(pl.BlockSpec(a.shape, lambda i: (0, 0)))
        out_specs = pl.BlockSpec((TB, NC_pad), lambda i: (i, 0))
        return pl.pallas_call(
            kernel,
            out_shape=jax.ShapeDtypeStruct((B_pad, NC_pad), jnp.float32),
            grid=grid,
            in_specs=in_specs,
            out_specs=out_specs,
            compiler_params=pltpu.CompilerParams(
                dimension_semantics=("parallel",),
                vmem_limit_bytes=vmem_limit),
            cost_estimate=pl.CostEstimate(
                flops=int(flops),
                transcendentals=int(transcendentals),
                bytes_accessed=int(bytes_accessed)),
        )(x3, *const_arrays)

    out_padded = None
    if single_buf:
        try:
            out_padded = jax.block_until_ready(_run(True))
        except Exception:
            out_padded = None          # fall back to default double-buffering
    if out_padded is None:
        out_padded = _run(False)

    return out_padded[:B, :n_classes]


def _init_linear(key, fan_in, fan_out):
    """PyTorch nn.Linear default init, stored transposed as (in, out)."""
    kw, kb = jax.random.split(key)
    bound = 1.0 / math.sqrt(fan_in)
    w = jax.random.uniform(kw, (fan_in, fan_out), jnp.float32, -bound, bound)
    b = jax.random.uniform(kb, (fan_out,), jnp.float32, -bound, bound)
    return w, b


def _reference(x, vit_params, layer_params):
    w_vit, b_vit = vit_params
    pooled = jnp.mean(x.astype(jnp.float32), axis=(2, 3))
    y = pooled @ w_vit + b_vit
    num_layers = len(layer_params)
    for i, (w, b) in enumerate(layer_params):
        y = y @ w + b
        if i != num_layers - 1:
            y = 0.5 * y * (1.0 + jax.lax.erf(y / jnp.sqrt(2.0)))
    return jax.nn.softmax(y, axis=1)


if __name__ == "__main__":
    # Small shapes consistent with the module: NCHW image input, ViT embed dim,
    # one hidden layer, and a class count.
    B, C, H, W = 2, 4, 16, 16
    vit_embed_dim = 32
    hidden_sizes = [64]
    n_classes = 16

    key = jax.random.PRNGKey(0)
    k_x, k_vit, *k_layers = jax.random.split(key, 2 + len(hidden_sizes) + 1)

    x = jax.random.normal(k_x, (B, C, H, W), jnp.float32)

    vit_params = _init_linear(k_vit, C, vit_embed_dim)
    sizes = [vit_embed_dim] + hidden_sizes + [n_classes]
    layer_params = [
        _init_linear(k_layers[i], sizes[i], sizes[i + 1])
        for i in range(len(sizes) - 1)
    ]

    out = jax.block_until_ready(finetuner_forward(x, vit_params, layer_params))
    ref = jax.block_until_ready(_reference(x, vit_params, layer_params))

    assert out.shape == (B, n_classes)
    # bf16 input stream -> small quantization error vs the pure-f32 reference
    assert np.allclose(np.asarray(out), np.asarray(ref), atol=2e-3, rtol=2e-3)
    # exact f32 divide in the softmax -> rows sum to 1 to f32 precision
    assert np.allclose(np.asarray(out).sum(axis=1), 1.0, atol=1e-3)

    print("KERNEL_OK")
</pallas_src>

<mosaic_0001>
module attributes {stable_mosaic.version = 11 : i64} {
  func.func @kernel(%arg0: i32, %arg1: memref<16x8x256xbf16, #tpu.memory_space<vmem>>, %arg2: memref<8x128xf32, #tpu.memory_space<vmem>>, %arg3: memref<1x128xf32, #tpu.memory_space<vmem>>, %arg4: memref<128x128xf32, #tpu.memory_space<vmem>>, %arg5: memref<1x128xf32, #tpu.memory_space<vmem>>, %arg6: memref<128x128xf32, #tpu.memory_space<vmem>>, %arg7: memref<1x128xf32, #tpu.memory_space<vmem>>, %arg8: memref<16x128xf32, #tpu.memory_space<vmem>>) attributes {dimension_semantics = [#tpu.dimension_semantics<parallel>], iteration_bounds = array<i64: 1>, scalar_prefetch = 0 : i64, scratch_operands = 0 : i64, tpu.core_type = #tpu.core_type<tc>, window_params = [{transform_indices = @transform_0, window_bounds = array<i64: 16, 8, 256>}, {pipeline_mode = #tpu.pipeline_mode<synchronous>, transform_indices = @transform_1, window_bounds = array<i64: 8, 128>}, {pipeline_mode = #tpu.pipeline_mode<synchronous>, transform_indices = @transform_2, window_bounds = array<i64: 1, 128>}, {pipeline_mode = #tpu.pipeline_mode<synchronous>, transform_indices = @transform_3, window_bounds = array<i64: 128, 128>}, {pipeline_mode = #tpu.pipeline_mode<synchronous>, transform_indices = @transform_4, window_bounds = array<i64: 1, 128>}, {pipeline_mode = #tpu.pipeline_mode<synchronous>, transform_indices = @transform_5, window_bounds = array<i64: 128, 128>}, {pipeline_mode = #tpu.pipeline_mode<synchronous>, transform_indices = @transform_6, window_bounds = array<i64: 1, 128>}, {transform_indices = @transform_7, window_bounds = array<i64: 16, 128>}]} {
    %c0 = arith.constant 0 : index
    %c0_0 = arith.constant 0 : index
    %c0_1 = arith.constant 0 : index
    %0 = vector.load %arg1[%c0, %c0_0, %c0_1] : memref<16x8x256xbf16, #tpu.memory_space<vmem>>, vector<16x8x256xbf16>
    %1 = arith.extf %0 : vector<16x8x256xbf16> to vector<16x8x256xf32>
    %cst = arith.constant dense<0.000000e+00> : vector<16x8xf32>
    %2 = vector.multi_reduction <add>, %1, %cst [2] : vector<16x8x256xf32> to vector<16x8xf32>
    %cst_2 = arith.constant 3.906250e-03 : f32
    %3 = vector.broadcast %cst_2 : f32 to vector<16x8xf32>
    %4 = arith.mulf %2, %3 : vector<16x8xf32>
    %c0_3 = arith.constant 0 : index
    %c0_4 = arith.constant 0 : index
    %5 = vector.load %arg2[%c0_3, %c0_4] : memref<8x128xf32, #tpu.memory_space<vmem>>, vector<8x128xf32>
    %cst_5 = arith.constant dense<0.000000e+00> : vector<16x128xf32>
    %6 = tpu.matmul %4, %5, %cst_5 {dimension_numbers = #tpu.dot_dimension_numbers<[1], [0], [0], [1], [0, 0, 1, 1], [], []>} : vector<16x8xf32>, vector<8x128xf32>, vector<16x128xf32> -> vector<16x128xf32>
    %c0_6 = arith.constant 0 : index
    %c0_7 = arith.constant 0 : index
    %7 = vector.load %arg3[%c0_6, %c0_7] : memref<1x128xf32, #tpu.memory_space<vmem>>, vector<1x128xf32>
    %8 = vector.broadcast %7 : vector<1x128xf32> to vector<16x128xf32>
    %9 = arith.addf %6, %8 : vector<16x128xf32>
    %c0_8 = arith.constant 0 : index
    %c0_9 = arith.constant 0 : index
    %10 = vector.load %arg4[%c0_8, %c0_9] : memref<128x128xf32, #tpu.memory_space<vmem>>, vector<128x128xf32>
    %c0_10 = arith.constant 0 : index
    %c0_11 = arith.constant 0 : index
    %11 = vector.load %arg5[%c0_10, %c0_11] : memref<1x128xf32, #tpu.memory_space<vmem>>, vector<1x128xf32>
    %cst_12 = arith.constant dense<0.000000e+00> : vector<16x128xf32>
    %12 = tpu.matmul %9, %10, %cst_12 {dimension_numbers = #tpu.dot_dimension_numbers<[1], [0], [0], [1], [0, 0, 1, 1], [], []>} : vector<16x128xf32>, vector<128x128xf32>, vector<16x128xf32> -> vector<16x128xf32>
    %13 = vector.broadcast %11 : vector<1x128xf32> to vector<16x128xf32>
    %14 = arith.addf %12, %13 : vector<16x128xf32>
    %cst_13 = arith.constant 5.000000e-01 : f32
    %15 = vector.broadcast %cst_13 : f32 to vector<16x128xf32>
    %16 = arith.mulf %15, %14 : vector<16x128xf32>
    %cst_14 = arith.constant 0.707106769 : f32
    %17 = vector.broadcast %cst_14 : f32 to vector<16x128xf32>
    %18 = arith.mulf %14, %17 : vector<16x128xf32>
    %19 = math.erf %18 : vector<16x128xf32>
    %cst_15 = arith.constant 1.000000e+00 : f32
    %20 = vector.broadcast %cst_15 : f32 to vector<16x128xf32>
    %21 = arith.addf %20, %19 : vector<16x128xf32>
    %22 = arith.mulf %16, %21 : vector<16x128xf32>
    %c0_16 = arith.constant 0 : index
    %c0_17 = arith.constant 0 : index
    %23 = vector.load %arg6[%c0_16, %c0_17] : memref<128x128xf32, #tpu.memory_space<vmem>>, vector<128x128xf32>
    %c0_18 = arith.constant 0 : index
    %c0_19 = arith.constant 0 : index
    %24 = vector.load %arg7[%c0_18, %c0_19] : memref<1x128xf32, #tpu.memory_space<vmem>>, vector<1x128xf32>
    %cst_20 = arith.constant dense<0.000000e+00> : vector<16x128xf32>
    %25 = tpu.matmul %22, %23, %cst_20 {dimension_numbers = #tpu.dot_dimension_numbers<[1], [0], [0], [1], [0, 0, 1, 1], [], []>} : vector<16x128xf32>, vector<128x128xf32>, vector<16x128xf32> -> vector<16x128xf32>
    %26 = vector.broadcast %24 : vector<1x128xf32> to vector<16x128xf32>
    %27 = arith.addf %25, %26 : vector<16x128xf32>
    %cst_21 = arith.constant dense<0xFF800000> : vector<16xf32>
    %28 = vector.multi_reduction <maximumf>, %27, %cst_21 [1] : vector<16x128xf32> to vector<16xf32>
    %29 = vector.shape_cast %28 : vector<16xf32> to vector<16x1xf32>
    %30 = vector.broadcast %29 : vector<16x1xf32> to vector<16x128xf32>
    %31 = arith.subf %27, %30 : vector<16x128xf32>
    %32 = math.exp %31 : vector<16x128xf32>
    %cst_22 = arith.constant dense<0.000000e+00> : vector<16xf32>
    %33 = vector.multi_reduction <add>, %32, %cst_22 [1] : vector<16x128xf32> to vector<16xf32>
    %34 = vector.shape_cast %33 : vector<16xf32> to vector<16x1xf32>
    %35 = vector.broadcast %34 : vector<16x1xf32> to vector<16x128xf32>
    %36 = arith.divf %32, %35 : vector<16x128xf32>
    %c0_23 = arith.constant 0 : index
    %c0_24 = arith.constant 0 : index
    %37 = vector.load %arg8[%c0_23, %c0_24] : memref<16x128xf32, #tpu.memory_space<vmem>>, vector<16x128xf32>
    tpu.vector_store %arg8[%c0_23, %c0_24], %36 {strides = array<i32>} : memref<16x128xf32, #tpu.memory_space<vmem>>, vector<16x128xf32>,
    return
  }
  func.func @transform_0(%arg0: i32) -> (i32, i32, i32) {
    %c0_i32 = arith.constant 0 : i32
    %c0_i32_0 = arith.constant 0 : i32
    %c0_i32_1 = arith.constant 0 : i32
    return %arg0, %c0_i32, %c0_i32_0 : i32, i32, i32
  }
  func.func @transform_1(%arg0: i32) -> (i32, i32) {
    %c0_i32 = arith.constant 0 : i32
    %c0_i32_0 = arith.constant 0 : i32
    %c0_i32_1 = arith.constant 0 : i32
    return %c0_i32, %c0_i32_0 : i32, i32
  }
  func.func @transform_2(%arg0: i32) -> (i32, i32) {
    %c0_i32 = arith.constant 0 : i32
    %c0_i32_0 = arith.constant 0 : i32
    %c0_i32_1 = arith.constant 0 : i32
    return %c0_i32, %c0_i32_0 : i32, i32
  }
  func.func @transform_3(%arg0: i32) -> (i32, i32) {
    %c0_i32 = arith.constant 0 : i32
    %c0_i32_0 = arith.constant 0 : i32
    %c0_i32_1 = arith.constant 0 : i32
    return %c0_i32, %c0_i32_0 : i32, i32
  }
  func.func @transform_4(%arg0: i32) -> (i32, i32) {
    %c0_i32 = arith.constant 0 : i32
    %c0_i32_0 = arith.constant 0 : i32
    %c0_i32_1 = arith.constant 0 : i32
    return %c0_i32, %c0_i32_0 : i32, i32
  }
  func.func @transform_5(%arg0: i32) -> (i32, i32) {
    %c0_i32 = arith.constant 0 : i32
    %c0_i32_0 = arith.constant 0 : i32
    %c0_i32_1 = arith.constant 0 : i32
    return %c0_i32, %c0_i32_0 : i32, i32
  }
  func.func @transform_6(%arg0: i32) -> (i32, i32) {
    %c0_i32 = arith.constant 0 : i32
    %c0_i32_0 = arith.constant 0 : i32
    %c0_i32_1 = arith.constant 0 : i32
    return %c0_i32, %c0_i32_0 : i32, i32
  }
  func.func @transform_7(%arg0: i32) -> (i32, i32) {
    %c0_i32 = arith.constant 0 : i32
    %c0_i32_0 = arith.constant 0 : i32
    return %arg0, %c0_i32 : i32, i32
  }
}

module attributes {stable_mosaic.version = 11 : i64} {
  func.func @kernel(%arg0: i32, %arg1: memref<16x8x256xbf16, #tpu.memory_space<vmem>>, %arg2: memref<8x128xf32, #tpu.memory_space<vmem>>, %arg3: memref<1x128xf32, #tpu.memory_space<vmem>>, %arg4: memref<128x128xf32, #tpu.memory_space<vmem>>, %arg5: memref<1x128xf32, #tpu.memory_space<vmem>>, %arg6: memref<128x128xf32, #tpu.memory_space<vmem>>, %arg7: memref<1x128xf32, #tpu.memory_space<vmem>>, %arg8: memref<16x128xf32, #tpu.memory_space<vmem>>) attributes {dimension_semantics = [#tpu.dimension_semantics<parallel>], iteration_bounds = array<i64: 1>, scalar_prefetch = 0 : i64, scratch_operands = 0 : i64, tpu.core_type = #tpu.core_type<tc>, window_params = [{transform_indices = @transform_0, window_bounds = array<i64: 16, 8, 256>}, {pipeline_mode = #tpu.pipeline_mode<synchronous>, transform_indices = @transform_1, window_bounds = array<i64: 8, 128>}, {pipeline_mode = #tpu.pipeline_mode<synchronous>, transform_indices = @transform_2, window_bounds = array<i64: 1, 128>}, {pipeline_mode = #tpu.pipeline_mode<synchronous>, transform_indices = @transform_3, window_bounds = array<i64: 128, 128>}, {pipeline_mode = #tpu.pipeline_mode<synchronous>, transform_indices = @transform_4, window_bounds = array<i64: 1, 128>}, {pipeline_mode = #tpu.pipeline_mode<synchronous>, transform_indices = @transform_5, window_bounds = array<i64: 128, 128>}, {pipeline_mode = #tpu.pipeline_mode<synchronous>, transform_indices = @transform_6, window_bounds = array<i64: 1, 128>}, {transform_indices = @transform_7, window_bounds = array<i64: 16, 128>}]} {
    %c0 = arith.constant 0 : index
    %c0_0 = arith.constant 0 : index
    %c0_1 = arith.constant 0 : index
    %0 = vector.load %arg1[%c0, %c0_0, %c0_1] : memref<16x8x256xbf16, #tpu.memory_space<vmem>>, vector<16x8x256xbf16>
    %1 = arith.extf %0 : vector<16x8x256xbf16> to vector<16x8x256xf32>
    %cst = arith.constant dense<0.000000e+00> : vector<16x8xf32>
    %2 = vector.multi_reduction <add>, %1, %cst [2] : vector<16x8x256xf32> to vector<16x8xf32>
    %cst_2 = arith.constant 3.906250e-03 : f32
    %3 = vector.broadcast %cst_2 : f32 to vector<16x8xf32>
    %4 = arith.mulf %2, %3 : vector<16x8xf32>
    %c0_3 = arith.constant 0 : index
    %c0_4 = arith.constant 0 : index
    %5 = vector.load %arg2[%c0_3, %c0_4] : memref<8x128xf32, #tpu.memory_space<vmem>>, vector<8x128xf32>
    %cst_5 = arith.constant dense<0.000000e+00> : vector<16x128xf32>
    %6 = tpu.matmul %4, %5, %cst_5 {dimension_numbers = #tpu.dot_dimension_numbers<[1], [0], [0], [1], [0, 0, 1, 1], [], []>} : vector<16x8xf32>, vector<8x128xf32>, vector<16x128xf32> -> vector<16x128xf32>
    %c0_6 = arith.constant 0 : index
    %c0_7 = arith.constant 0 : index
    %7 = vector.load %arg3[%c0_6, %c0_7] : memref<1x128xf32, #tpu.memory_space<vmem>>, vector<1x128xf32>
    %8 = vector.broadcast %7 : vector<1x128xf32> to vector<16x128xf32>
    %9 = arith.addf %6, %8 : vector<16x128xf32>
    %c0_8 = arith.constant 0 : index
    %c0_9 = arith.constant 0 : index
    %10 = vector.load %arg4[%c0_8, %c0_9] : memref<128x128xf32, #tpu.memory_space<vmem>>, vector<128x128xf32>
    %c0_10 = arith.constant 0 : index
    %c0_11 = arith.constant 0 : index
    %11 = vector.load %arg5[%c0_10, %c0_11] : memref<1x128xf32, #tpu.memory_space<vmem>>, vector<1x128xf32>
    %cst_12 = arith.constant dense<0.000000e+00> : vector<16x128xf32>
    %12 = tpu.matmul %9, %10, %cst_12 {dimension_numbers = #tpu.dot_dimension_numbers<[1], [0], [0], [1], [0, 0, 1, 1], [], []>} : vector<16x128xf32>, vector<128x128xf32>, vector<16x128xf32> -> vector<16x128xf32>
    %13 = vector.broadcast %11 : vector<1x128xf32> to vector<16x128xf32>
    %14 = arith.addf %12, %13 : vector<16x128xf32>
    %cst_13 = arith.constant 5.000000e-01 : f32
    %15 = vector.broadcast %cst_13 : f32 to vector<16x128xf32>
    %16 = arith.mulf %15, %14 : vector<16x128xf32>
    %cst_14 = arith.constant 0.707106769 : f32
    %17 = vector.broadcast %cst_14 : f32 to vector<16x128xf32>
    %18 = arith.mulf %14, %17 : vector<16x128xf32>
    %19 = math.erf %18 : vector<16x128xf32>
    %cst_15 = arith.constant 1.000000e+00 : f32
    %20 = vector.broadcast %cst_15 : f32 to vector<16x128xf32>
    %21 = arith.addf %20, %19 : vector<16x128xf32>
    %22 = arith.mulf %16, %21 : vector<16x128xf32>
    %c0_16 = arith.constant 0 : index
    %c0_17 = arith.constant 0 : index
    %23 = vector.load %arg6[%c0_16, %c0_17] : memref<128x128xf32, #tpu.memory_space<vmem>>, vector<128x128xf32>
    %c0_18 = arith.constant 0 : index
    %c0_19 = arith.constant 0 : index
    %24 = vector.load %arg7[%c0_18, %c0_19] : memref<1x128xf32, #tpu.memory_space<vmem>>, vector<1x128xf32>
    %cst_20 = arith.constant dense<0.000000e+00> : vector<16x128xf32>
    %25 = tpu.matmul %22, %23, %cst_20 {dimension_numbers = #tpu.dot_dimension_numbers<[1], [0], [0], [1], [0, 0, 1, 1], [], []>} : vector<16x128xf32>, vector<128x128xf32>, vector<16x128xf32> -> vector<16x128xf32>
    %26 = vector.broadcast %24 : vector<1x128xf32> to vector<16x128xf32>
    %27 = arith.addf %25, %26 : vector<16x128xf32>
    %cst_21 = arith.constant dense<0xFF800000> : vector<16xf32>
    %28 = vector.multi_reduction <maximumf>, %27, %cst_21 [1] : vector<16x128xf32> to vector<16xf32>
    %29 = vector.shape_cast %28 : vector<16xf32> to vector<16x1xf32>
    %30 = vector.broadcast %29 : vector<16x1xf32> to vector<16x128xf32>
    %31 = arith.subf %27, %30 : vector<16x128xf32>
    %32 = math.exp %31 : vector<16x128xf32>
    %cst_22 = arith.constant dense<0.000000e+00> : vector<16xf32>
    %33 = vector.multi_reduction <add>, %32, %cst_22 [1] : vector<16x128xf32> to vector<16xf32>
    %34 = vector.shape_cast %33 : vector<16xf32> to vector<16x1xf32>
    %35 = vector.broadcast %34 : vector<16x1xf32> to vector<16x128xf32>
    %36 = arith.divf %32, %35 : vector<16x128xf32>
    %c0_23 = arith.constant 0 : index
    %c0_24 = arith.constant 0 : index
    %37 = vector.load %arg8[%c0_23, %c0_24] : memref<16x128xf32, #tpu.memory_space<vmem>>, vector<16x128xf32>
    tpu.vector_store %arg8[%c0_23, %c0_24], %36 {strides = array<i32>} : memref<16x128xf32, #tpu.memory_space<vmem>>, vector<16x128xf32>,
    return
  }
  func.func @transform_0(%arg0: i32) -> (i32, i32, i32) {
    %c0_i32 = arith.constant 0 : i32
    %c0_i32_0 = arith.constant 0 : i32
    %c0_i32_1 = arith.constant 0 : i32
    return %arg0, %c0_i32, %c0_i32_0 : i32, i32, i32
  }
  func.func @transform_1(%arg0: i32) -> (i32, i32) {
    %c0_i32 = arith.constant 0 : i32
    %c0_i32_0 = arith.constant 0 : i32
    %c0_i32_1 = arith.constant 0 : i32
    return %c0_i32, %c0_i32_0 : i32, i32
  }
  func.func @transform_2(%arg0: i32) -> (i32, i32) {
    %c0_i32 = arith.constant 0 : i32
    %c0_i32_0 = arith.constant 0 : i32
    %c0_i32_1 = arith.constant 0 : i32
    return %c0_i32, %c0_i32_0 : i32, i32
  }
  func.func @transform_3(%arg0: i32) -> (i32, i32) {
    %c0_i32 = arith.constant 0 : i32
    %c0_i32_0 = arith.constant 0 : i32
    %c0_i32_1 = arith.constant 0 : i32
    return %c0_i32, %c0_i32_0 : i32, i32
  }
  func.func @transform_4(%arg0: i32) -> (i32, i32) {
    %c0_i32 = arith.constant 0 : i32
    %c0_i32_0 = arith.constant 0 : i32
    %c0_i32_1 = arith.constant 0 : i32
    return %c0_i32, %c0_i32_0 : i32, i32
  }
  func.func @transform_5(%arg0: i32) -> (i32, i32) {
    %c0_i32 = arith.constant 0 : i32
    %c0_i32_0 = arith.constant 0 : i32
    %c0_i32_1 = arith.constant 0 : i32
    return %c0_i32, %c0_i32_0 : i32, i32
  }
  func.func @transform_6(%arg0: i32) -> (i32, i32) {
    %c0_i32 = arith.constant 0 : i32
    %c0_i32_0 = arith.constant 0 : i32
    %c0_i32_1 = arith.constant 0 : i32
    return %c0_i32, %c0_i32_0 : i32, i32
  }
  func.func @transform_7(%arg0: i32) -> (i32, i32) {
    %c0_i32 = arith.constant 0 : i32
    %c0_i32_0 = arith.constant 0 : i32
    return %arg0, %c0_i32 : i32, i32
  }
}

</mosaic_0001>

<llo_original>
// kernel: tpu_custom_call.1
$region0: #{tpu_custom_call.1}
  #allocation0 [shape = 'u32[]', space=smem, size = 0x4, offset = 0x4, fixed_abs, tag = 'smem constant byte address 0x4 - core index']
  #allocation1 [shape = 'u32[144,128]{1,0:T(1,128)}', space=vmem, size = 0x12000, scoped, tag = 'internal scratch']
  %s0 = inlined_call_operand.hbm [shape: bf16[16,8,256], index: 0, kind: input, shape index: {}]
  %s1 = inlined_call_operand.hbm [shape: f32[8,128], index: 1, kind: input, shape index: {}]
  %s2 = inlined_call_operand.vmem [shape: f32[1,128], index: 2, kind: input, shape index: {}]
  %s3 = inlined_call_operand.hbm [shape: f32[128,128], index: 3, kind: input, shape index: {}]
  %s4 = inlined_call_operand.vmem [shape: f32[1,128], index: 4, kind: input, shape index: {}]
  %s5 = inlined_call_operand.hbm [shape: f32[128,128], index: 5, kind: input, shape index: {}]
  %s6 = inlined_call_operand.vmem [shape: f32[1,128], index: 6, kind: input, shape index: {}]
  %s7 = inlined_call_operand.hbm [shape: f32[16,128], index: 7, kind: output, shape index: {}]
  %s8 = sld [smem:[#allocation0]]
  $region54: #{tpu_custom_call.1} parent=0
    _
  %s10 = ssub.s32 1, %s8
  %s11 = scalar_select 0, %s10, %s8
  $region1: #{tpu_custom_call.1} parent=0
    #allocation2 [shape = 'u8[65536]{0}', space=vmem, size = 0x10000, scoped, tag = 'input window, operand 0, single buffered']
    #allocation3 [shape = 's32[1]{0}', space=sflag, size = 0x4, scoped, tag = 'scoped memory for tpu_custom_call.1']
    #allocation4 [shape = 's32[1]{0}', space=sflag, size = 0x4, scoped, tag = 'scoped memory for tpu_custom_call.1']
    #allocation5 [shape = 'u8[4096]{0}', space=vmem, size = 0x1000, scoped, tag = 'input window, operand 1, single buffered']
    #allocation6 [shape = 's32[1]{0}', space=sflag, size = 0x4, scoped, tag = 'scoped memory for tpu_custom_call.1']
    #allocation7 [shape = 'u8[65536]{0}', space=vmem, size = 0x10000, scoped, tag = 'input window, operand 3, single buffered']
    #allocation8 [shape = 'u8[65536]{0}', space=vmem, size = 0x10000, scoped, tag = 'input window, operand 5, single buffered']
    #allocation9 [shape = 's32[1]{0}', space=sflag, size = 0x4, scoped, tag = 'scoped memory for tpu_custom_call.1']
    #allocation10 [shape = 'u8[8192]{0}', space=vmem, size = 0x2000, scoped, tag = 'output window, operand 0, single buffered']
    %12 = vsyncpa [#allocation3], 0
    %13 = vsyncpa [#allocation6], 0
    %14 = vsyncpa [#allocation9], 0
    %15 = vsyncpa [#allocation4], 0
    // Predicated region
    $region2: #{tpu_custom_call.1} parent=1 // pred_check
      _
    $region3: #{tpu_custom_call.1} parent=1 // pred_check_branch
      %17 = sbr.rel (0) target = $region5
    $region4: #{tpu_custom_call.1} parent=1 // pred_region
      %s19 = ssub.s32 2048, 2048
      %20 = vsyncadd [#allocation3], %s19
      %s21 = sshll.u32 [#allocation2], 4
      %s22 = int_to_ptr.vmem [resolvable:$true] %s21
      %27 = dma.hbm_to_vmem [thread:$0]  %s0, 2048, %s22, [#allocation3], 128, 128, 8
    $region5: #{tpu_custom_call.1} parent=1 // pred_fallthru
      _
    // Predicated region
    $region6: #{tpu_custom_call.1} parent=1 // pred_check
      _
    $region7: #{tpu_custom_call.1} parent=1 // pred_check_branch
      %29 = sbr.rel (0) target = $region9
    $region8: #{tpu_custom_call.1} parent=1 // pred_region
      %s31 = ssub.s32 128, 128
      %32 = vsyncadd [#allocation6], %s31
      %s34 = sshll.u32 [#allocation5], 4
      %s35 = int_to_ptr.vmem [resolvable:$true] %s34
      %37 = dma.hbm_to_vmem [thread:$0]  %s1, 128, %s35, [#allocation6]
    $region9: #{tpu_custom_call.1} parent=1 // pred_fallthru
      _
    // Predicated region
    $region10: #{tpu_custom_call.1} parent=1 // pred_check
      _
    $region11: #{tpu_custom_call.1} parent=1 // pred_check_branch
      %39 = sbr.rel (0) target = $region13
    $region12: #{tpu_custom_call.1} parent=1 // pred_region
      _
    $region13: #{tpu_custom_call.1} parent=1 // pred_fallthru
      _
    // Predicated region
    $region14: #{tpu_custom_call.1} parent=1 // pred_check
      _
    $region15: #{tpu_custom_call.1} parent=1 // pred_check_branch
      %41 = sbr.rel (0) target = $region17
    $region16: #{tpu_custom_call.1} parent=1 // pred_region
      %s43 = ssub.s32 2048, 2048
      %44 = vsyncadd [#allocation6], %s43
      %s45 = sshll.u32 [#allocation7], 4
      %s46 = int_to_ptr.vmem [resolvable:$true] %s45
      %51 = dma.hbm_to_vmem [thread:$0]  %s3, 2048, %s46, [#allocation6], 128, 128, 8
    $region17: #{tpu_custom_call.1} parent=1 // pred_fallthru
      _
    // Predicated region
    $region18: #{tpu_custom_call.1} parent=1 // pred_check
      _
    $region19: #{tpu_custom_call.1} parent=1 // pred_check_branch
      %53 = sbr.rel (0) target = $region21
    $region20: #{tpu_custom_call.1} parent=1 // pred_region
      _
    $region21: #{tpu_custom_call.1} parent=1 // pred_fallthru
      _
    // Predicated region
    $region22: #{tpu_custom_call.1} parent=1 // pred_check
      _
    $region23: #{tpu_custom_call.1} parent=1 // pred_check_branch
      %55 = sbr.rel (0) target = $region25
    $region24: #{tpu_custom_call.1} parent=1 // pred_region
      %s57 = ssub.s32 2048, 2048
      %58 = vsyncadd [#allocation9], %s57
      %s59 = sshll.u32 [#allocation8], 4
      %s60 = int_to_ptr.vmem [resolvable:$true] %s59
      %65 = dma.hbm_to_vmem [thread:$0]  %s5, 2048, %s60, [#allocation9], 128, 128, 8
    $region25: #{tpu_custom_call.1} parent=1 // pred_fallthru
      _
    // Predicated region
    $region26: #{tpu_custom_call.1} parent=1 // pred_check
      _
    $region27: #{tpu_custom_call.1} parent=1 // pred_check_branch
      %67 = sbr.rel (0) target = $region29
    $region28: #{tpu_custom_call.1} parent=1 // pred_region
      _
    $region29: #{tpu_custom_call.1} parent=1 // pred_fallthru
      _
    // Predicated region
    $region30: #{tpu_custom_call.1} parent=1 // pred_check
      _
    $region31: #{tpu_custom_call.1} parent=1 // pred_check_branch
      %69 = sbr.rel (0) target = $region33
    $region32: #{tpu_custom_call.1} parent=1 // pred_region
      %70 = dma.done [#allocation3], 2048
    $region33: #{tpu_custom_call.1} parent=1 // pred_fallthru
      _
    // Predicated region
    $region34: #{tpu_custom_call.1} parent=1 // pred_check
      _
    $region35: #{tpu_custom_call.1} parent=1 // pred_check_branch
      %72 = sbr.rel (0) target = $region37
    $region36: #{tpu_custom_call.1} parent=1 // pred_region
      %73 = dma.done [#allocation6], 128
    $region37: #{tpu_custom_call.1} parent=1 // pred_fallthru
      _
    // Predicated region
    $region38: #{tpu_custom_call.1} parent=1 // pred_check
      _
    $region39: #{tpu_custom_call.1} parent=1 // pred_check_branch
      %75 = sbr.rel (0) target = $region41
    $region40: #{tpu_custom_call.1} parent=1 // pred_region
      %76 = dma.done [#allocation6], 2048
    $region41: #{tpu_custom_call.1} parent=1 // pred_fallthru
      _
    // Predicated region
    $region42: #{tpu_custom_call.1} parent=1 // pred_check
      _
    $region43: #{tpu_custom_call.1} parent=1 // pred_check_branch
      %78 = sbr.rel (0) target = $region45
    $region44: #{tpu_custom_call.1} parent=1 // pred_region
      %79 = dma.done [#allocation9], 2048
    $region45: #{tpu_custom_call.1} parent=1 // pred_fallthru
      _
    %v80 = vld [vmem:[#allocation2] sm:$0xff]
    %v81 = vld [vmem:[#allocation2 + $0x8] sm:$0xff]
    %v82 = vld [vmem:[#allocation2 + $0x10] sm:$0xff]
    %v83 = vld [vmem:[#allocation2 + $0x18] sm:$0xff]
    %v84 = vld [vmem:[#allocation2 + $0x20] sm:$0xff]
    %v85 = vld [vmem:[#allocation2 + $0x28] sm:$0xff]
    %v86 = vld [vmem:[#allocation2 + $0x30] sm:$0xff]
    %v87 = vld [vmem:[#allocation2 + $0x38] sm:$0xff]
    %v88 = vld [vmem:[#allocation2 + $0x40] sm:$0xff]
    %v89 = vld [vmem:[#allocation2 + $0x48] sm:$0xff]
    %v90 = vld [vmem:[#allocation2 + $0x50] sm:$0xff]
    %v91 = vld [vmem:[#allocation2 + $0x58] sm:$0xff]
    %v92 = vld [vmem:[#allocation2 + $0x60] sm:$0xff]
    %v93 = vld [vmem:[#allocation2 + $0x68] sm:$0xff]
    %v94 = vld [vmem:[#allocation2 + $0x70] sm:$0xff]
    %v95 = vld [vmem:[#allocation2 + $0x78] sm:$0xff]
    %v96 = vunpack.c.l.bf16 %v80
    %v97 = vunpack.c.h.bf16 %v80
    %v98 = vunpack.c.l.bf16 %v81
    %v99 = vunpack.c.h.bf16 %v81
    %v100 = vunpack.c.l.bf16 %v82
    %v101 = vunpack.c.h.bf16 %v82
    %v102 = vunpack.c.l.bf16 %v83
    %v103 = vunpack.c.h.bf16 %v83
    %v104 = vunpack.c.l.bf16 %v84
    %v105 = vunpack.c.h.bf16 %v84
    %v106 = vunpack.c.l.bf16 %v85
    %v107 = vunpack.c.h.bf16 %v85
    %v108 = vunpack.c.l.bf16 %v86
    %v109 = vunpack.c.h.bf16 %v86
    %v110 = vunpack.c.l.bf16 %v87
    %v111 = vunpack.c.h.bf16 %v87
    %v112 = vunpack.c.l.bf16 %v88
    %v113 = vunpack.c.h.bf16 %v88
    %v114 = vunpack.c.l.bf16 %v89
    %v115 = vunpack.c.h.bf16 %v89
    %v116 = vunpack.c.l.bf16 %v90
    %v117 = vunpack.c.h.bf16 %v90
    %v118 = vunpack.c.l.bf16 %v91
    %v119 = vunpack.c.h.bf16 %v91
    %v120 = vunpack.c.l.bf16 %v92
    %v121 = vunpack.c.h.bf16 %v92
    %v122 = vunpack.c.l.bf16 %v93
    %v123 = vunpack.c.h.bf16 %v93
    %v124 = vunpack.c.l.bf16 %v94
    %v125 = vunpack.c.h.bf16 %v94
    %v126 = vunpack.c.l.bf16 %v95
    %v127 = vunpack.c.h.bf16 %v95
    %v128 = vadd.f32 %v96, %v97
    %129 = vadd.xlane.f32.xlu0 %v128
    %v130 = vpop.xlane.xlu0 %129
    %v131 = vadd.f32 %v98, %v99
    %132 = vadd.xlane.f32.xlu0 %v131
    %v133 = vpop.xlane.xlu0 %132
    %v134 = vadd.f32 %v100, %v101
    %135 = vadd.xlane.f32.xlu0 %v134
    %v136 = vpop.xlane.xlu0 %135
    %v137 = vadd.f32 %v102, %v103
    %138 = vadd.xlane.f32.xlu0 %v137
    %v139 = vpop.xlane.xlu0 %138
    %v140 = vadd.f32 %v104, %v105
    %141 = vadd.xlane.f32.xlu0 %v140
    %v142 = vpop.xlane.xlu0 %141
    %v143 = vadd.f32 %v106, %v107
    %144 = vadd.xlane.f32.xlu0 %v143
    %v145 = vpop.xlane.xlu0 %144
    %v146 = vadd.f32 %v108, %v109
    %147 = vadd.xlane.f32.xlu0 %v146
    %v148 = vpop.xlane.xlu0 %147
    %v149 = vadd.f32 %v110, %v111
    %150 = vadd.xlane.f32.xlu0 %v149
    %v151 = vpop.xlane.xlu0 %150
    %v152 = vadd.f32 %v112, %v113
    %153 = vadd.xlane.f32.xlu0 %v152
    %v154 = vpop.xlane.xlu0 %153
    %v155 = vadd.f32 %v114, %v115
    %156 = vadd.xlane.f32.xlu0 %v155
    %v157 = vpop.xlane.xlu0 %156
    %v158 = vadd.f32 %v116, %v117
    %159 = vadd.xlane.f32.xlu0 %v158
    %v160 = vpop.xlane.xlu0 %159
    %v161 = vadd.f32 %v118, %v119
    %162 = vadd.xlane.f32.xlu0 %v161
    %v163 = vpop.xlane.xlu0 %162
    %v164 = vadd.f32 %v120, %v121
    %165 = vadd.xlane.f32.xlu0 %v164
    %v166 = vpop.xlane.xlu0 %165
    %v167 = vadd.f32 %v122, %v123
    %168 = vadd.xlane.f32.xlu0 %v167
    %v169 = vpop.xlane.xlu0 %168
    %v170 = vadd.f32 %v124, %v125
    %171 = vadd.xlane.f32.xlu0 %v170
    %v172 = vpop.xlane.xlu0 %171
    %v173 = vadd.f32 %v126, %v127
    %174 = vadd.xlane.f32.xlu0 %v173
    %v175 = vpop.xlane.xlu0 %174
    %v176 = vmul.f32 %v130, 0.00390625
    %v177 = vmul.f32 %v133, 0.00390625
    %v178 = vmul.f32 %v136, 0.00390625
    %v179 = vmul.f32 %v139, 0.00390625
    %v180 = vmul.f32 %v142, 0.00390625
    %v181 = vmul.f32 %v145, 0.00390625
    %v182 = vmul.f32 %v148, 0.00390625
    %v183 = vmul.f32 %v151, 0.00390625
    %v184 = vmul.f32 %v154, 0.00390625
    %v185 = vmul.f32 %v157, 0.00390625
    %v186 = vmul.f32 %v160, 0.00390625
    %v187 = vmul.f32 %v163, 0.00390625
    %v188 = vmul.f32 %v166, 0.00390625
    %v189 = vmul.f32 %v169, 0.00390625
    %v190 = vmul.f32 %v172, 0.00390625
    %v191 = vmul.f32 %v175, 0.00390625
    %v192 = vld [vmem:[#allocation5] sm:$0xff]
    %v193 = vld [vmem:[%s2] sm:$0x1]
    %v195 = vlaneseq
    %v196 = vshrl.u32 %v195, 7
    %v197 = vsub.s32 0, %v196
    %v198 = vrot.slane %v193, %v197
    %v216 = vlaneseq
    %v217 = vand.u32 %v216, 127
    %v218 = vlaneseq
    %v219 = vshrl.u32 %v218, 7
    %v220 = vsub.s32 %v217, %v219
    %v221 = vrot.slane %v176, %v220
    %v222 = vlaneseq
    %v223 = vshrl.u32 %v222, 7
    %v224 = vsub.s32 %v217, %v223
    %v225 = vrot.slane %v177, %v224
    %v226 = vlaneseq
    %v227 = vshrl.u32 %v226, 7
    %v228 = vsub.s32 %v217, %v227
    %v229 = vrot.slane %v178, %v228
    %v230 = vlaneseq
    %v231 = vshrl.u32 %v230, 7
    %v232 = vsub.s32 %v217, %v231
    %v233 = vrot.slane %v179, %v232
    %v234 = vlaneseq
    %v235 = vshrl.u32 %v234, 7
    %v236 = vsub.s32 %v217, %v235
    %v237 = vrot.slane %v180, %v236
    %v238 = vlaneseq
    %v239 = vshrl.u32 %v238, 7
    %v240 = vsub.s32 %v217, %v239
    %v241 = vrot.slane %v181, %v240
    %v242 = vlaneseq
    %v243 = vshrl.u32 %v242, 7
    %v244 = vsub.s32 %v217, %v243
    %v245 = vrot.slane %v182, %v244
    %v246 = vlaneseq
    %v247 = vshrl.u32 %v246, 7
    %v248 = vsub.s32 %v217, %v247
    %v249 = vrot.slane %v183, %v248
    %v250 = vlaneseq
    %v251 = vshrl.u32 %v250, 7
    %v252 = vsub.s32 %v217, %v251
    %v253 = vrot.slane %v184, %v252
    %v254 = vlaneseq
    %v255 = vshrl.u32 %v254, 7
    %v256 = vsub.s32 %v217, %v255
    %v257 = vrot.slane %v185, %v256
    %v258 = vlaneseq
    %v259 = vshrl.u32 %v258, 7
    %v260 = vsub.s32 %v217, %v259
    %v261 = vrot.slane %v186, %v260
    %v262 = vlaneseq
    %v263 = vshrl.u32 %v262, 7
    %v264 = vsub.s32 %v217, %v263
    %v265 = vrot.slane %v187, %v264
    %v266 = vlaneseq
    %v267 = vshrl.u32 %v266, 7
    %v268 = vsub.s32 %v217, %v267
    %v269 = vrot.slane %v188, %v268
    %v270 = vlaneseq
    %v271 = vshrl.u32 %v270, 7
    %v272 = vsub.s32 %v217, %v271
    %v273 = vrot.slane %v189, %v272
    %v274 = vlaneseq
    %v275 = vshrl.u32 %v274, 7
    %v276 = vsub.s32 %v217, %v275
    %v277 = vrot.slane %v190, %v276
    %v278 = vlaneseq
    %v279 = vshrl.u32 %v278, 7
    %v280 = vsub.s32 %v217, %v279
    %v281 = vrot.slane %v191, %v280
    %vm282 = vcmask 1041409
    %v283 = vsel %vm282, %v225, %v221
    %vm284 = vcmask 1042434
    %v285 = vsel %vm284, %v229, %v283
    %vm286 = vcmask 1043459
    %v287 = vsel %vm286, %v233, %v285
    %vm288 = vcmask 1044484
    %v289 = vsel %vm288, %v237, %v287
    %vm290 = vcmask 1045509
    %v291 = vsel %vm290, %v241, %v289
    %vm292 = vcmask 1046534
    %v293 = vsel %vm292, %v245, %v291
    %vm294 = vcmask 1047559
    %v295 = vsel %vm294, %v249, %v293
    %v296 = vsel %vm282, %v257, %v253
    %v297 = vsel %vm284, %v261, %v296
    %v298 = vsel %vm286, %v265, %v297
    %v299 = vsel %vm288, %v269, %v298
    %v300 = vsel %vm290, %v273, %v299
    %v301 = vsel %vm292, %v277, %v300
    %v302 = vsel %vm294, %v281, %v301
    %vm303 = vcmask 64512
    %v304 = vsel %vm303, %v295, 0
    %v306 = vsel %vm303, %v302, 0
    %308 = vmatprep.subr.mxu0 0.0
    %309 = vmatpush1.msra.mxu0 0.0
    %310 = vmatprep.subr.mxu0 0.0
    %311 = vmatpush1.msra.mxu0 0.0
    %312 = vmatprep.subr.mxu0 0.0
    %313 = vmatpush1.msra.mxu0 0.0
    %314 = vmatprep.subr.mxu0 0.0
    %315 = vmatpush1.msra.mxu0 0.0
    %316 = vmatprep.subr.mxu0 0.0
    %317 = vmatpush1.msra.mxu0 0.0
    %318 = vmatprep.subr.mxu0 0.0
    %319 = vmatpush1.msra.mxu0 0.0
    %320 = vmatprep.subr.mxu0 0.0
    %321 = vmatpush1.msra.mxu0 0.0
    %322 = vmatprep.subr.mxu0 0.0
    %323 = vmatpush1.msra.mxu0 0.0
    %324 = vmatprep.subr.mxu0 0.0
    %325 = vmatpush1.msra.mxu0 0.0
    %326 = vmatprep.subr.mxu0 0.0
    %327 = vmatpush1.msra.mxu0 0.0
    %328 = vmatprep.subr.mxu0 0.0
    %329 = vmatpush1.msra.mxu0 0.0
    %330 = vmatprep.subr.mxu0 0.0
    %331 = vmatpush1.msra.mxu0 0.0
    %332 = vmatprep.subr.mxu0 0.0
    %333 = vmatpush1.msra.mxu0 0.0
    %334 = vmatprep.subr.mxu0 0.0
    %335 = vmatpush1.msra.mxu0 0.0
    %336 = vmatprep.subr.mxu0 0.0
    %337 = vmatpush1.msra.mxu0 0.0
    %338 = vmatprep.subr.mxu0 0.0
    %339 = vmatpush1.msra.mxu0 %v192
    %340 = vmatprep.subr.mxu0 0.0
    %341 = vmatpush2.msra.mxu0 0.0
    %342 = vmatprep.subr.mxu0 0.0
    %343 = vmatpush2.msra.mxu0 0.0
    %344 = vmatprep.subr.mxu0 0.0
    %345 = vmatpush2.msra.mxu0 0.0
    %346 = vmatprep.subr.mxu0 0.0
    %347 = vmatpush2.msra.mxu0 0.0
    %348 = vmatprep.subr.mxu0 0.0
    %349 = vmatpush2.msra.mxu0 0.0
    %350 = vmatprep.subr.mxu0 0.0
    %351 = vmatpush2.msra.mxu0 0.0
    %352 = vmatprep.subr.mxu0 0.0
    %353 = vmatpush2.msra.mxu0 0.0
    %354 = vmatprep.subr.mxu0 0.0
    %355 = vmatpush2.msra.mxu0 0.0
    %356 = vmatprep.subr.mxu0 0.0
    %357 = vmatpush2.msra.mxu0 0.0
    %358 = vmatprep.subr.mxu0 0.0
    %359 = vmatpush2.msra.mxu0 0.0
    %360 = vmatprep.subr.mxu0 0.0
    %361 = vmatpush2.msra.mxu0 0.0
    %362 = vmatprep.subr.mxu0 0.0
    %363 = vmatpush2.msra.mxu0 0.0
    %364 = vmatprep.subr.mxu0 0.0
    %365 = vmatpush2.msra.mxu0 0.0
    %366 = vmatprep.subr.mxu0 0.0
    %367 = vmatpush2.msra.mxu0 0.0
    %368 = vmatprep.subr.mxu0 0.0
    %369 = vmatpush2.msra.mxu0 0.0
    %370 = vmatprep.subr.mxu0 0.0
    %371 = vmatpush2.msra.mxu0 0.0
    %372 = vmatprep.mubr.f32.mxu0 0.0
    %373 = vmatmul.mubr.f32.gmra.mxu0 %v304
    %v374 = vpop.f32.mrf.mxu0
    %v375 = vadd.f32 %v198, %v374
    %v376 = vpop.f32.mrf.mxu0
    %377 = vmatprep.mubr.f32.mxu0 0.0
    %378 = vmatmul.mubr.f32.gmra.mxu0 %v306
    %v379 = vpop.f32.mrf.mxu0
    %v380 = vadd.f32 %v198, %v379
    %v381 = vpop.f32.mrf.mxu0
    %382 = vdwg.mxu0
    %v383 = vld [vmem:[#allocation7] sm:$0xff]
    %v384 = vld [vmem:[#allocation7 + $0x8] sm:$0xff]
    %v385 = vld [vmem:[#allocation7 + $0x10] sm:$0xff]
    %v386 = vld [vmem:[#allocation7 + $0x18] sm:$0xff]
    %v387 = vld [vmem:[#allocation7 + $0x20] sm:$0xff]
    %v388 = vld [vmem:[#allocation7 + $0x28] sm:$0xff]
    %v389 = vld [vmem:[#allocation7 + $0x30] sm:$0xff]
    %v390 = vld [vmem:[#allocation7 + $0x38] sm:$0xff]
    %v391 = vld [vmem:[#allocation7 + $0x40] sm:$0xff]
    %v392 = vld [vmem:[#allocation7 + $0x48] sm:$0xff]
    %v393 = vld [vmem:[#allocation7 + $0x50] sm:$0xff]
    %v394 = vld [vmem:[#allocation7 + $0x58] sm:$0xff]
    %v395 = vld [vmem:[#allocation7 + $0x60] sm:$0xff]
    %v396 = vld [vmem:[#allocation7 + $0x68] sm:$0xff]
    %v397 = vld [vmem:[#allocation7 + $0x70] sm:$0xff]
    %v398 = vld [vmem:[#allocation7 + $0x78] sm:$0xff]
    %v399 = vld [vmem:[%s4] sm:$0x1]
    %v401 = vlaneseq
    %v402 = vshrl.u32 %v401, 7
    %v403 = vsub.s32 0, %v402
    %v404 = vrot.slane %v399, %v403
    %406 = vmatprep.subr.mxu0 0.0
    %407 = vmatpush1.msra.mxu0 %v398
    %408 = vmatprep.subr.mxu0 0.0
    %409 = vmatpush1.msra.mxu0 %v397
    %410 = vmatprep.subr.mxu0 0.0
    %411 = vmatpush1.msra.mxu0 %v396
    %412 = vmatprep.subr.mxu0 0.0
    %413 = vmatpush1.msra.mxu0 %v395
    %414 = vmatprep.subr.mxu0 0.0
    %415 = vmatpush1.msra.mxu0 %v394
    %416 = vmatprep.subr.mxu0 0.0
    %417 = vmatpush1.msra.mxu0 %v393
    %418 = vmatprep.subr.mxu0 0.0
    %419 = vmatpush1.msra.mxu0 %v392
    %420 = vmatprep.subr.mxu0 0.0
    %421 = vmatpush1.msra.mxu0 %v391
    %422 = vmatprep.subr.mxu0 0.0
    %423 = vmatpush1.msra.mxu0 %v390
    %424 = vmatprep.subr.mxu0 0.0
    %425 = vmatpush1.msra.mxu0 %v389
    %426 = vmatprep.subr.mxu0 0.0
    %427 = vmatpush1.msra.mxu0 %v388
    %428 = vmatprep.subr.mxu0 0.0
    %429 = vmatpush1.msra.mxu0 %v387
    %430 = vmatprep.subr.mxu0 0.0
    %431 = vmatpush1.msra.mxu0 %v386
    %432 = vmatprep.subr.mxu0 0.0
    %433 = vmatpush1.msra.mxu0 %v385
    %434 = vmatprep.subr.mxu0 0.0
    %435 = vmatpush1.msra.mxu0 %v384
    %436 = vmatprep.subr.mxu0 0.0
    %437 = vmatpush1.msra.mxu0 %v383
    %438 = vmatprep.subr.mxu0 0.0
    %439 = vmatpush2.msra.mxu0 0.0
    %440 = vmatprep.subr.mxu0 0.0
    %441 = vmatpush2.msra.mxu0 0.0
    %442 = vmatprep.subr.mxu0 0.0
    %443 = vmatpush2.msra.mxu0 0.0
    %444 = vmatprep.subr.mxu0 0.0
    %445 = vmatpush2.msra.mxu0 0.0
    %446 = vmatprep.subr.mxu0 0.0
    %447 = vmatpush2.msra.mxu0 0.0
    %448 = vmatprep.subr.mxu0 0.0
    %449 = vmatpush2.msra.mxu0 0.0
    %450 = vmatprep.subr.mxu0 0.0
    %451 = vmatpush2.msra.mxu0 0.0
    %452 = vmatprep.subr.mxu0 0.0
    %453 = vmatpush2.msra.mxu0 0.0
    %454 = vmatprep.subr.mxu0 0.0
    %455 = vmatpush2.msra.mxu0 0.0
    %456 = vmatprep.subr.mxu0 0.0
    %457 = vmatpush2.msra.mxu0 0.0
    %458 = vmatprep.subr.mxu0 0.0
    %459 = vmatpush2.msra.mxu0 0.0
    %460 = vmatprep.subr.mxu0 0.0
    %461 = vmatpush2.msra.mxu0 0.0
    %462 = vmatprep.subr.mxu0 0.0
    %463 = vmatpush2.msra.mxu0 0.0
    %464 = vmatprep.subr.mxu0 0.0
    %465 = vmatpush2.msra.mxu0 0.0
    %466 = vmatprep.subr.mxu0 0.0
    %467 = vmatpush2.msra.mxu0 0.0
    %468 = vmatprep.subr.mxu0 0.0
    %469 = vmatpush2.msra.mxu0 0.0
    %470 = vmatprep.mubr.f32.mxu0 0.0
    %471 = vmatmul.mubr.f32.gmra.mxu0 %v375
    %v472 = vpop.f32.mrf.mxu0
    %v473 = vadd.f32 %v404, %v472
    %v474 = vpop.f32.mrf.mxu0
    %475 = vmatprep.mubr.f32.mxu0 0.0
    %476 = vmatmul.mubr.f32.gmra.mxu0 %v380
    %v477 = vpop.f32.mrf.mxu0
    %v478 = vadd.f32 %v404, %v477
    %v479 = vpop.f32.mrf.mxu0
    %480 = vdwg.mxu0
    %v481 = vmul.f32 %v473, 0.5
    %v482 = vmul.f32 %v478, 0.5
    %v483 = vmul.f32 %v473, 0.70710677
    %v484 = vmul.f32 %v478, 0.70710677
    %v485 = verf.f32.pop %v483
    %v486 = verf.f32.pop %v484
    %v487 = vadd.f32 %v485, 1.0
    %v488 = vadd.f32 %v486, 1.0
    %v489 = vmul.f32 %v481, %v487
    %v490 = vmul.f32 %v482, %v488
    %v491 = vld [vmem:[#allocation8] sm:$0xff]
    %v492 = vld [vmem:[#allocation8 + $0x8] sm:$0xff]
    %v493 = vld [vmem:[#allocation8 + $0x10] sm:$0xff]
    %v494 = vld [vmem:[#allocation8 + $0x18] sm:$0xff]
    %v495 = vld [vmem:[#allocation8 + $0x20] sm:$0xff]
    %v496 = vld [vmem:[#allocation8 + $0x28] sm:$0xff]
    %v497 = vld [vmem:[#allocation8 + $0x30] sm:$0xff]
    %v498 = vld [vmem:[#allocation8 + $0x38] sm:$0xff]
    %v499 = vld [vmem:[#allocation8 + $0x40] sm:$0xff]
    %v500 = vld [vmem:[#allocation8 + $0x48] sm:$0xff]
    %v501 = vld [vmem:[#allocation8 + $0x50] sm:$0xff]
    %v502 = vld [vmem:[#allocation8 + $0x58] sm:$0xff]
    %v503 = vld [vmem:[#allocation8 + $0x60] sm:$0xff]
    %v504 = vld [vmem:[#allocation8 + $0x68] sm:$0xff]
    %v505 = vld [vmem:[#allocation8 + $0x70] sm:$0xff]
    %v506 = vld [vmem:[#allocation8 + $0x78] sm:$0xff]
    %v507 = vld [vmem:[%s6] sm:$0x1]
    %v509 = vlaneseq
    %v510 = vshrl.u32 %v509, 7
    %v511 = vsub.s32 0, %v510
    %v512 = vrot.slane %v507, %v511
    %514 = vmatprep.subr.mxu0 0.0
    %515 = vmatpush1.msra.mxu0 %v506
    %516 = vmatprep.subr.mxu0 0.0
    %517 = vmatpush1.msra.mxu0 %v505
    %518 = vmatprep.subr.mxu0 0.0
    %519 = vmatpush1.msra.mxu0 %v504
    %520 = vmatprep.subr.mxu0 0.0
    %521 = vmatpush1.msra.mxu0 %v503
    %522 = vmatprep.subr.mxu0 0.0
    %523 = vmatpush1.msra.mxu0 %v502
    %524 = vmatprep.subr.mxu0 0.0
    %525 = vmatpush1.msra.mxu0 %v501
    %526 = vmatprep.subr.mxu0 0.0
    %527 = vmatpush1.msra.mxu0 %v500
    %528 = vmatprep.subr.mxu0 0.0
    %529 = vmatpush1.msra.mxu0 %v499
    %530 = vmatprep.subr.mxu0 0.0
    %531 = vmatpush1.msra.mxu0 %v498
    %532 = vmatprep.subr.mxu0 0.0
    %533 = vmatpush1.msra.mxu0 %v497
    %534 = vmatprep.subr.mxu0 0.0
    %535 = vmatpush1.msra.mxu0 %v496
    %536 = vmatprep.subr.mxu0 0.0
    %537 = vmatpush1.msra.mxu0 %v495
    %538 = vmatprep.subr.mxu0 0.0
    %539 = vmatpush1.msra.mxu0 %v494
    %540 = vmatprep.subr.mxu0 0.0
    %541 = vmatpush1.msra.mxu0 %v493
    %542 = vmatprep.subr.mxu0 0.0
    %543 = vmatpush1.msra.mxu0 %v492
    %544 = vmatprep.subr.mxu0 0.0
    %545 = vmatpush1.msra.mxu0 %v491
    %546 = vmatprep.subr.mxu0 0.0
    %547 = vmatpush2.msra.mxu0 0.0
    %548 = vmatprep.subr.mxu0 0.0
    %549 = vmatpush2.msra.mxu0 0.0
    %550 = vmatprep.subr.mxu0 0.0
    %551 = vmatpush2.msra.mxu0 0.0
    %552 = vmatprep.subr.mxu0 0.0
    %553 = vmatpush2.msra.mxu0 0.0
    %554 = vmatprep.subr.mxu0 0.0
    %555 = vmatpush2.msra.mxu0 0.0
    %556 = vmatprep.subr.mxu0 0.0
    %557 = vmatpush2.msra.mxu0 0.0
    %558 = vmatprep.subr.mxu0 0.0
    %559 = vmatpush2.msra.mxu0 0.0
    %560 = vmatprep.subr.mxu0 0.0
    %561 = vmatpush2.msra.mxu0 0.0
    %562 = vmatprep.subr.mxu0 0.0
    %563 = vmatpush2.msra.mxu0 0.0
    %564 = vmatprep.subr.mxu0 0.0
    %565 = vmatpush2.msra.mxu0 0.0
    %566 = vmatprep.subr.mxu0 0.0
    %567 = vmatpush2.msra.mxu0 0.0
    %568 = vmatprep.subr.mxu0 0.0
    %569 = vmatpush2.msra.mxu0 0.0
    %570 = vmatprep.subr.mxu0 0.0
    %571 = vmatpush2.msra.mxu0 0.0
    %572 = vmatprep.subr.mxu0 0.0
    %573 = vmatpush2.msra.mxu0 0.0
    %574 = vmatprep.subr.mxu0 0.0
    %575 = vmatpush2.msra.mxu0 0.0
    %576 = vmatprep.subr.mxu0 0.0
    %577 = vmatpush2.msra.mxu0 0.0
    %578 = vmatprep.mubr.f32.mxu0 0.0
    %579 = vmatmul.mubr.f32.gmra.mxu0 %v489
    %v580 = vpop.f32.mrf.mxu0
    %v581 = vadd.f32 %v512, %v580
    %v582 = vpop.f32.mrf.mxu0
    %583 = vmatprep.mubr.f32.mxu0 0.0
    %584 = vmatmul.mubr.f32.gmra.mxu0 %v490
    %v585 = vpop.f32.mrf.mxu0
    %v586 = vadd.f32 %v512, %v585
    %v587 = vpop.f32.mrf.mxu0
    %588 = vdwg.mxu0
    %589 = vmax.xlane.f32.xlu0 %v581
    %v590 = vpop.xlane.xlu0 %589
    %591 = vmax.xlane.f32.xlu0 %v586
    %v592 = vpop.xlane.xlu0 %591
    %v593 = vsub.f32 %v581, %v590
    %v594 = vsub.f32 %v586, %v592
    %v595 = vmul.f32 %v593, 1.442695
    %v596 = vpow.pop %v595
    %v597 = vmul.f32 %v594, 1.442695
    %v598 = vpow.pop %v597
    %599 = vadd.xlane.f32.xlu0 %v596
    %v600 = vpop.xlane.xlu0 %599
    %601 = vadd.xlane.f32.xlu0 %v598
    %v602 = vpop.xlane.xlu0 %601
    %v603 = vrcp.pop %v600
    %v604 = vmul.f32 %v596, %v603
    %v605 = vrcp.pop %v602
    %v606 = vmul.f32 %v598, %v605
    %607 = vst [vmem:[#allocation10] sm:$0xff] %v604
    %608 = vst [vmem:[#allocation10 + $0x8] sm:$0xff] %v606
    // Predicated region
    $region46: #{tpu_custom_call.1} parent=1 // pred_check
      _
    $region47: #{tpu_custom_call.1} parent=1 // pred_check_branch
      %610 = sbr.rel (0) target = $region49
    $region48: #{tpu_custom_call.1} parent=1 // pred_region
      %s612 = ssub.s32 256, 256
      %613 = vsyncadd [#allocation4], %s612
      %s614 = sshll.u32 [#allocation10], 4
      %s615 = int_to_ptr.vmem [resolvable:$true] %s614
      %620 = dma.vmem_to_hbm [thread:$0]  %s615, 256, %s7, [#allocation4], 128, 128, 8
    $region49: #{tpu_custom_call.1} parent=1 // pred_fallthru
      _
    // Predicated region
    $region50: #{tpu_custom_call.1} parent=1 // pred_check
      _
    $region51: #{tpu_custom_call.1} parent=1 // pred_check_branch
      %622 = sbr.rel (0) target = $region53
    $region52: #{tpu_custom_call.1} parent=1 // pred_region
      %623 = dma.done [#allocation4], 256
    $region53: #{tpu_custom_call.1} parent=1 // pred_fallthru
      _
    %624 = vsyncpa [#allocation3], 1
    %625 = vsyncpa [#allocation6], 1
    %626 = vsyncpa [#allocation9], 1
    %627 = vsyncpa [#allocation4], 1

// kernel: tpu_custom_call.1
$region0: #{tpu_custom_call.1}
  #allocation0 [shape = 'u32[]', space=smem, size = 0x4, offset = 0x4, fixed_abs, tag = 'smem constant byte address 0x4 - core index']
  #allocation1 [shape = 'u32[144,128]{1,0:T(1,128)}', space=vmem, size = 0x12000, scoped, tag = 'internal scratch']
  %s0 = inlined_call_operand.hbm [shape: bf16[16,8,256], index: 0, kind: input, shape index: {}]
  %s1 = inlined_call_operand.hbm [shape: f32[8,128], index: 1, kind: input, shape index: {}]
  %s2 = inlined_call_operand.vmem [shape: f32[1,128], index: 2, kind: input, shape index: {}]
  %s3 = inlined_call_operand.hbm [shape: f32[128,128], index: 3, kind: input, shape index: {}]
  %s4 = inlined_call_operand.vmem [shape: f32[1,128], index: 4, kind: input, shape index: {}]
  %s5 = inlined_call_operand.hbm [shape: f32[128,128], index: 5, kind: input, shape index: {}]
  %s6 = inlined_call_operand.vmem [shape: f32[1,128], index: 6, kind: input, shape index: {}]
  %s7 = inlined_call_operand.hbm [shape: f32[16,128], index: 7, kind: output, shape index: {}]
  %s8 = sld [smem:[#allocation0]]
  $region54: #{tpu_custom_call.1} parent=0
    _
  %s10 = ssub.s32 1, %s8
  %s11 = scalar_select 0, %s10, %s8
  $region1: #{tpu_custom_call.1} parent=0
    #allocation2 [shape = 'u8[65536]{0}', space=vmem, size = 0x10000, scoped, tag = 'input window, operand 0, single buffered']
    #allocation3 [shape = 's32[1]{0}', space=sflag, size = 0x4, scoped, tag = 'scoped memory for tpu_custom_call.1']
    #allocation4 [shape = 's32[1]{0}', space=sflag, size = 0x4, scoped, tag = 'scoped memory for tpu_custom_call.1']
    #allocation5 [shape = 'u8[4096]{0}', space=vmem, size = 0x1000, scoped, tag = 'input window, operand 1, single buffered']
    #allocation6 [shape = 's32[1]{0}', space=sflag, size = 0x4, scoped, tag = 'scoped memory for tpu_custom_call.1']
    #allocation7 [shape = 'u8[65536]{0}', space=vmem, size = 0x10000, scoped, tag = 'input window, operand 3, single buffered']
    #allocation8 [shape = 'u8[65536]{0}', space=vmem, size = 0x10000, scoped, tag = 'input window, operand 5, single buffered']
    #allocation9 [shape = 's32[1]{0}', space=sflag, size = 0x4, scoped, tag = 'scoped memory for tpu_custom_call.1']
    #allocation10 [shape = 'u8[8192]{0}', space=vmem, size = 0x2000, scoped, tag = 'output window, operand 0, single buffered']
    %12 = vsyncpa [#allocation3], 0
    %13 = vsyncpa [#allocation6], 0
    %14 = vsyncpa [#allocation9], 0
    %15 = vsyncpa [#allocation4], 0
    // Predicated region
    $region2: #{tpu_custom_call.1} parent=1 // pred_check
      _
    $region3: #{tpu_custom_call.1} parent=1 // pred_check_branch
      %17 = sbr.rel (0) target = $region5
    $region4: #{tpu_custom_call.1} parent=1 // pred_region
      %s19 = ssub.s32 2048, 2048
      %20 = vsyncadd [#allocation3], %s19
      %s21 = sshll.u32 [#allocation2], 4
      %s22 = int_to_ptr.vmem [resolvable:$true] %s21
      %27 = dma.hbm_to_vmem [thread:$0]  %s0, 2048, %s22, [#allocation3], 128, 128, 8
    $region5: #{tpu_custom_call.1} parent=1 // pred_fallthru
      _
    // Predicated region
    $region6: #{tpu_custom_call.1} parent=1 // pred_check
      _
    $region7: #{tpu_custom_call.1} parent=1 // pred_check_branch
      %29 = sbr.rel (0) target = $region9
    $region8: #{tpu_custom_call.1} parent=1 // pred_region
      %s31 = ssub.s32 128, 128
      %32 = vsyncadd [#allocation6], %s31
      %s34 = sshll.u32 [#allocation5], 4
      %s35 = int_to_ptr.vmem [resolvable:$true] %s34
      %37 = dma.hbm_to_vmem [thread:$0]  %s1, 128, %s35, [#allocation6]
    $region9: #{tpu_custom_call.1} parent=1 // pred_fallthru
      _
    // Predicated region
    $region10: #{tpu_custom_call.1} parent=1 // pred_check
      _
    $region11: #{tpu_custom_call.1} parent=1 // pred_check_branch
      %39 = sbr.rel (0) target = $region13
    $region12: #{tpu_custom_call.1} parent=1 // pred_region
      _
    $region13: #{tpu_custom_call.1} parent=1 // pred_fallthru
      _
    // Predicated region
    $region14: #{tpu_custom_call.1} parent=1 // pred_check
      _
    $region15: #{tpu_custom_call.1} parent=1 // pred_check_branch
      %41 = sbr.rel (0) target = $region17
    $region16: #{tpu_custom_call.1} parent=1 // pred_region
      %s43 = ssub.s32 2048, 2048
      %44 = vsyncadd [#allocation6], %s43
      %s45 = sshll.u32 [#allocation7], 4
      %s46 = int_to_ptr.vmem [resolvable:$true] %s45
      %51 = dma.hbm_to_vmem [thread:$0]  %s3, 2048, %s46, [#allocation6], 128, 128, 8
    $region17: #{tpu_custom_call.1} parent=1 // pred_fallthru
      _
    // Predicated region
    $region18: #{tpu_custom_call.1} parent=1 // pred_check
      _
    $region19: #{tpu_custom_call.1} parent=1 // pred_check_branch
      %53 = sbr.rel (0) target = $region21
    $region20: #{tpu_custom_call.1} parent=1 // pred_region
      _
    $region21: #{tpu_custom_call.1} parent=1 // pred_fallthru
      _
    // Predicated region
    $region22: #{tpu_custom_call.1} parent=1 // pred_check
      _
    $region23: #{tpu_custom_call.1} parent=1 // pred_check_branch
      %55 = sbr.rel (0) target = $region25
    $region24: #{tpu_custom_call.1} parent=1 // pred_region
      %s57 = ssub.s32 2048, 2048
      %58 = vsyncadd [#allocation9], %s57
      %s59 = sshll.u32 [#allocation8], 4
      %s60 = int_to_ptr.vmem [resolvable:$true] %s59
      %65 = dma.hbm_to_vmem [thread:$0]  %s5, 2048, %s60, [#allocation9], 128, 128, 8
    $region25: #{tpu_custom_call.1} parent=1 // pred_fallthru
      _
    // Predicated region
    $region26: #{tpu_custom_call.1} parent=1 // pred_check
      _
    $region27: #{tpu_custom_call.1} parent=1 // pred_check_branch
      %67 = sbr.rel (0) target = $region29
    $region28: #{tpu_custom_call.1} parent=1 // pred_region
      _
    $region29: #{tpu_custom_call.1} parent=1 // pred_fallthru
      _
    // Predicated region
    $region30: #{tpu_custom_call.1} parent=1 // pred_check
      _
    $region31: #{tpu_custom_call.1} parent=1 // pred_check_branch
      %69 = sbr.rel (0) target = $region33
    $region32: #{tpu_custom_call.1} parent=1 // pred_region
      %70 = dma.done [#allocation3], 2048
    $region33: #{tpu_custom_call.1} parent=1 // pred_fallthru
      _
    // Predicated region
    $region34: #{tpu_custom_call.1} parent=1 // pred_check
      _
    $region35: #{tpu_custom_call.1} parent=1 // pred_check_branch
      %72 = sbr.rel (0) target = $region37
    $region36: #{tpu_custom_call.1} parent=1 // pred_region
      %73 = dma.done [#allocation6], 128
    $region37: #{tpu_custom_call.1} parent=1 // pred_fallthru
      _
    // Predicated region
    $region38: #{tpu_custom_call.1} parent=1 // pred_check
      _
    $region39: #{tpu_custom_call.1} parent=1 // pred_check_branch
      %75 = sbr.rel (0) target = $region41
    $region40: #{tpu_custom_call.1} parent=1 // pred_region
      %76 = dma.done [#allocation6], 2048
    $region41: #{tpu_custom_call.1} parent=1 // pred_fallthru
      _
    // Predicated region
    $region42: #{tpu_custom_call.1} parent=1 // pred_check
      _
    $region43: #{tpu_custom_call.1} parent=1 // pred_check_branch
      %78 = sbr.rel (0) target = $region45
    $region44: #{tpu_custom_call.1} parent=1 // pred_region
      %79 = dma.done [#allocation9], 2048
    $region45: #{tpu_custom_call.1} parent=1 // pred_fallthru
      _
    %v80 = vld [vmem:[#allocation2] sm:$0xff]
    %v81 = vld [vmem:[#allocation2 + $0x8] sm:$0xff]
    %v82 = vld [vmem:[#allocation2 + $0x10] sm:$0xff]
    %v83 = vld [vmem:[#allocation2 + $0x18] sm:$0xff]
    %v84 = vld [vmem:[#allocation2 + $0x20] sm:$0xff]
    %v85 = vld [vmem:[#allocation2 + $0x28] sm:$0xff]
    %v86 = vld [vmem:[#allocation2 + $0x30] sm:$0xff]
    %v87 = vld [vmem:[#allocation2 + $0x38] sm:$0xff]
    %v88 = vld [vmem:[#allocation2 + $0x40] sm:$0xff]
    %v89 = vld [vmem:[#allocation2 + $0x48] sm:$0xff]
    %v90 = vld [vmem:[#allocation2 + $0x50] sm:$0xff]
    %v91 = vld [vmem:[#allocation2 + $0x58] sm:$0xff]
    %v92 = vld [vmem:[#allocation2 + $0x60] sm:$0xff]
    %v93 = vld [vmem:[#allocation2 + $0x68] sm:$0xff]
    %v94 = vld [vmem:[#allocation2 + $0x70] sm:$0xff]
    %v95 = vld [vmem:[#allocation2 + $0x78] sm:$0xff]
    %v96 = vunpack.c.l.bf16 %v80
    %v97 = vunpack.c.h.bf16 %v80
    %v98 = vunpack.c.l.bf16 %v81
    %v99 = vunpack.c.h.bf16 %v81
    %v100 = vunpack.c.l.bf16 %v82
    %v101 = vunpack.c.h.bf16 %v82
    %v102 = vunpack.c.l.bf16 %v83
    %v103 = vunpack.c.h.bf16 %v83
    %v104 = vunpack.c.l.bf16 %v84
    %v105 = vunpack.c.h.bf16 %v84
    %v106 = vunpack.c.l.bf16 %v85
    %v107 = vunpack.c.h.bf16 %v85
    %v108 = vunpack.c.l.bf16 %v86
    %v109 = vunpack.c.h.bf16 %v86
    %v110 = vunpack.c.l.bf16 %v87
    %v111 = vunpack.c.h.bf16 %v87
    %v112 = vunpack.c.l.bf16 %v88
    %v113 = vunpack.c.h.bf16 %v88
    %v114 = vunpack.c.l.bf16 %v89
    %v115 = vunpack.c.h.bf16 %v89
    %v116 = vunpack.c.l.bf16 %v90
    %v117 = vunpack.c.h.bf16 %v90
    %v118 = vunpack.c.l.bf16 %v91
    %v119 = vunpack.c.h.bf16 %v91
    %v120 = vunpack.c.l.bf16 %v92
    %v121 = vunpack.c.h.bf16 %v92
    %v122 = vunpack.c.l.bf16 %v93
    %v123 = vunpack.c.h.bf16 %v93
    %v124 = vunpack.c.l.bf16 %v94
    %v125 = vunpack.c.h.bf16 %v94
    %v126 = vunpack.c.l.bf16 %v95
    %v127 = vunpack.c.h.bf16 %v95
    %v128 = vadd.f32 %v96, %v97
    %129 = vadd.xlane.f32.xlu0 %v128
    %v130 = vpop.xlane.xlu0 %129
    %v131 = vadd.f32 %v98, %v99
    %132 = vadd.xlane.f32.xlu0 %v131
    %v133 = vpop.xlane.xlu0 %132
    %v134 = vadd.f32 %v100, %v101
    %135 = vadd.xlane.f32.xlu0 %v134
    %v136 = vpop.xlane.xlu0 %135
    %v137 = vadd.f32 %v102, %v103
    %138 = vadd.xlane.f32.xlu0 %v137
    %v139 = vpop.xlane.xlu0 %138
    %v140 = vadd.f32 %v104, %v105
    %141 = vadd.xlane.f32.xlu0 %v140
    %v142 = vpop.xlane.xlu0 %141
    %v143 = vadd.f32 %v106, %v107
    %144 = vadd.xlane.f32.xlu0 %v143
    %v145 = vpop.xlane.xlu0 %144
    %v146 = vadd.f32 %v108, %v109
    %147 = vadd.xlane.f32.xlu0 %v146
    %v148 = vpop.xlane.xlu0 %147
    %v149 = vadd.f32 %v110, %v111
    %150 = vadd.xlane.f32.xlu0 %v149
    %v151 = vpop.xlane.xlu0 %150
    %v152 = vadd.f32 %v112, %v113
    %153 = vadd.xlane.f32.xlu0 %v152
    %v154 = vpop.xlane.xlu0 %153
    %v155 = vadd.f32 %v114, %v115
    %156 = vadd.xlane.f32.xlu0 %v155
    %v157 = vpop.xlane.xlu0 %156
    %v158 = vadd.f32 %v116, %v117
    %159 = vadd.xlane.f32.xlu0 %v158
    %v160 = vpop.xlane.xlu0 %159
    %v161 = vadd.f32 %v118, %v119
    %162 = vadd.xlane.f32.xlu0 %v161
    %v163 = vpop.xlane.xlu0 %162
    %v164 = vadd.f32 %v120, %v121
    %165 = vadd.xlane.f32.xlu0 %v164
    %v166 = vpop.xlane.xlu0 %165
    %v167 = vadd.f32 %v122, %v123
    %168 = vadd.xlane.f32.xlu0 %v167
    %v169 = vpop.xlane.xlu0 %168
    %v170 = vadd.f32 %v124, %v125
    %171 = vadd.xlane.f32.xlu0 %v170
    %v172 = vpop.xlane.xlu0 %171
    %v173 = vadd.f32 %v126, %v127
    %174 = vadd.xlane.f32.xlu0 %v173
    %v175 = vpop.xlane.xlu0 %174
    %v176 = vmul.f32 %v130, 0.00390625
    %v177 = vmul.f32 %v133, 0.00390625
    %v178 = vmul.f32 %v136, 0.00390625
    %v179 = vmul.f32 %v139, 0.00390625
    %v180 = vmul.f32 %v142, 0.00390625
    %v181 = vmul.f32 %v145, 0.00390625
    %v182 = vmul.f32 %v148, 0.00390625
    %v183 = vmul.f32 %v151, 0.00390625
    %v184 = vmul.f32 %v154, 0.00390625
    %v185 = vmul.f32 %v157, 0.00390625
    %v186 = vmul.f32 %v160, 0.00390625
    %v187 = vmul.f32 %v163, 0.00390625
    %v188 = vmul.f32 %v166, 0.00390625
    %v189 = vmul.f32 %v169, 0.00390625
    %v190 = vmul.f32 %v172, 0.00390625
    %v191 = vmul.f32 %v175, 0.00390625
    %v192 = vld [vmem:[#allocation5] sm:$0xff]
    %v193 = vld [vmem:[%s2] sm:$0x1]
    %v195 = vlaneseq
    %v196 = vshrl.u32 %v195, 7
    %v197 = vsub.s32 0, %v196
    %v198 = vrot.slane %v193, %v197
    %v216 = vlaneseq
    %v217 = vand.u32 %v216, 127
    %v218 = vlaneseq
    %v219 = vshrl.u32 %v218, 7
    %v220 = vsub.s32 %v217, %v219
    %v221 = vrot.slane %v176, %v220
    %v222 = vlaneseq
    %v223 = vshrl.u32 %v222, 7
    %v224 = vsub.s32 %v217, %v223
    %v225 = vrot.slane %v177, %v224
    %v226 = vlaneseq
    %v227 = vshrl.u32 %v226, 7
    %v228 = vsub.s32 %v217, %v227
    %v229 = vrot.slane %v178, %v228
    %v230 = vlaneseq
    %v231 = vshrl.u32 %v230, 7
    %v232 = vsub.s32 %v217, %v231
    %v233 = vrot.slane %v179, %v232
    %v234 = vlaneseq
    %v235 = vshrl.u32 %v234, 7
    %v236 = vsub.s32 %v217, %v235
    %v237 = vrot.slane %v180, %v236
    %v238 = vlaneseq
    %v239 = vshrl.u32 %v238, 7
    %v240 = vsub.s32 %v217, %v239
    %v241 = vrot.slane %v181, %v240
    %v242 = vlaneseq
    %v243 = vshrl.u32 %v242, 7
    %v244 = vsub.s32 %v217, %v243
    %v245 = vrot.slane %v182, %v244
    %v246 = vlaneseq
    %v247 = vshrl.u32 %v246, 7
    %v248 = vsub.s32 %v217, %v247
    %v249 = vrot.slane %v183, %v248
    %v250 = vlaneseq
    %v251 = vshrl.u32 %v250, 7
    %v252 = vsub.s32 %v217, %v251
    %v253 = vrot.slane %v184, %v252
    %v254 = vlaneseq
    %v255 = vshrl.u32 %v254, 7
    %v256 = vsub.s32 %v217, %v255
    %v257 = vrot.slane %v185, %v256
    %v258 = vlaneseq
    %v259 = vshrl.u32 %v258, 7
    %v260 = vsub.s32 %v217, %v259
    %v261 = vrot.slane %v186, %v260
    %v262 = vlaneseq
    %v263 = vshrl.u32 %v262, 7
    %v264 = vsub.s32 %v217, %v263
    %v265 = vrot.slane %v187, %v264
    %v266 = vlaneseq
    %v267 = vshrl.u32 %v266, 7
    %v268 = vsub.s32 %v217, %v267
    %v269 = vrot.slane %v188, %v268
    %v270 = vlaneseq
    %v271 = vshrl.u32 %v270, 7
    %v272 = vsub.s32 %v217, %v271
    %v273 = vrot.slane %v189, %v272
    %v274 = vlaneseq
    %v275 = vshrl.u32 %v274, 7
    %v276 = vsub.s32 %v217, %v275
    %v277 = vrot.slane %v190, %v276
    %v278 = vlaneseq
    %v279 = vshrl.u32 %v278, 7
    %v280 = vsub.s32 %v217, %v279
    %v281 = vrot.slane %v191, %v280
    %vm282 = vcmask 1041409
    %v283 = vsel %vm282, %v225, %v221
    %vm284 = vcmask 1042434
    %v285 = vsel %vm284, %v229, %v283
    %vm286 = vcmask 1043459
    %v287 = vsel %vm286, %v233, %v285
    %vm288 = vcmask 1044484
    %v289 = vsel %vm288, %v237, %v287
    %vm290 = vcmask 1045509
    %v291 = vsel %vm290, %v241, %v289
    %vm292 = vcmask 1046534
    %v293 = vsel %vm292, %v245, %v291
    %vm294 = vcmask 1047559
    %v295 = vsel %vm294, %v249, %v293
    %v296 = vsel %vm282, %v257, %v253
    %v297 = vsel %vm284, %v261, %v296
    %v298 = vsel %vm286, %v265, %v297
    %v299 = vsel %vm288, %v269, %v298
    %v300 = vsel %vm290, %v273, %v299
    %v301 = vsel %vm292, %v277, %v300
    %v302 = vsel %vm294, %v281, %v301
    %vm303 = vcmask 64512
    %v304 = vsel %vm303, %v295, 0
    %v306 = vsel %vm303, %v302, 0
    %308 = vmatprep.subr.mxu0 0.0
    %309 = vmatpush1.msra.mxu0 0.0
    %310 = vmatprep.subr.mxu0 0.0
    %311 = vmatpush1.msra.mxu0 0.0
    %312 = vmatprep.subr.mxu0 0.0
    %313 = vmatpush1.msra.mxu0 0.0
    %314 = vmatprep.subr.mxu0 0.0
    %315 = vmatpush1.msra.mxu0 0.0
    %316 = vmatprep.subr.mxu0 0.0
    %317 = vmatpush1.msra.mxu0 0.0
    %318 = vmatprep.subr.mxu0 0.0
    %319 = vmatpush1.msra.mxu0 0.0
    %320 = vmatprep.subr.mxu0 0.0
    %321 = vmatpush1.msra.mxu0 0.0
    %322 = vmatprep.subr.mxu0 0.0
    %323 = vmatpush1.msra.mxu0 0.0
    %324 = vmatprep.subr.mxu0 0.0
    %325 = vmatpush1.msra.mxu0 0.0
    %326 = vmatprep.subr.mxu0 0.0
    %327 = vmatpush1.msra.mxu0 0.0
    %328 = vmatprep.subr.mxu0 0.0
    %329 = vmatpush1.msra.mxu0 0.0
    %330 = vmatprep.subr.mxu0 0.0
    %331 = vmatpush1.msra.mxu0 0.0
    %332 = vmatprep.subr.mxu0 0.0
    %333 = vmatpush1.msra.mxu0 0.0
    %334 = vmatprep.subr.mxu0 0.0
    %335 = vmatpush1.msra.mxu0 0.0
    %336 = vmatprep.subr.mxu0 0.0
    %337 = vmatpush1.msra.mxu0 0.0
    %338 = vmatprep.subr.mxu0 0.0
    %339 = vmatpush1.msra.mxu0 %v192
    %340 = vmatprep.subr.mxu0 0.0
    %341 = vmatpush2.msra.mxu0 0.0
    %342 = vmatprep.subr.mxu0 0.0
    %343 = vmatpush2.msra.mxu0 0.0
    %344 = vmatprep.subr.mxu0 0.0
    %345 = vmatpush2.msra.mxu0 0.0
    %346 = vmatprep.subr.mxu0 0.0
    %347 = vmatpush2.msra.mxu0 0.0
    %348 = vmatprep.subr.mxu0 0.0
    %349 = vmatpush2.msra.mxu0 0.0
    %350 = vmatprep.subr.mxu0 0.0
    %351 = vmatpush2.msra.mxu0 0.0
    %352 = vmatprep.subr.mxu0 0.0
    %353 = vmatpush2.msra.mxu0 0.0
    %354 = vmatprep.subr.mxu0 0.0
    %355 = vmatpush2.msra.mxu0 0.0
    %356 = vmatprep.subr.mxu0 0.0
    %357 = vmatpush2.msra.mxu0 0.0
    %358 = vmatprep.subr.mxu0 0.0
    %359 = vmatpush2.msra.mxu0 0.0
    %360 = vmatprep.subr.mxu0 0.0
    %361 = vmatpush2.msra.mxu0 0.0
    %362 = vmatprep.subr.mxu0 0.0
    %363 = vmatpush2.msra.mxu0 0.0
    %364 = vmatprep.subr.mxu0 0.0
    %365 = vmatpush2.msra.mxu0 0.0
    %366 = vmatprep.subr.mxu0 0.0
    %367 = vmatpush2.msra.mxu0 0.0
    %368 = vmatprep.subr.mxu0 0.0
    %369 = vmatpush2.msra.mxu0 0.0
    %370 = vmatprep.subr.mxu0 0.0
    %371 = vmatpush2.msra.mxu0 0.0
    %372 = vmatprep.mubr.f32.mxu0 0.0
    %373 = vmatmul.mubr.f32.gmra.mxu0 %v304
    %v374 = vpop.f32.mrf.mxu0
    %v375 = vadd.f32 %v198, %v374
    %v376 = vpop.f32.mrf.mxu0
    %377 = vmatprep.mubr.f32.mxu0 0.0
    %378 = vmatmul.mubr.f32.gmra.mxu0 %v306
    %v379 = vpop.f32.mrf.mxu0
    %v380 = vadd.f32 %v198, %v379
    %v381 = vpop.f32.mrf.mxu0
    %382 = vdwg.mxu0
    %v383 = vld [vmem:[#allocation7] sm:$0xff]
    %v384 = vld [vmem:[#allocation7 + $0x8] sm:$0xff]
    %v385 = vld [vmem:[#allocation7 + $0x10] sm:$0xff]
    %v386 = vld [vmem:[#allocation7 + $0x18] sm:$0xff]
    %v387 = vld [vmem:[#allocation7 + $0x20] sm:$0xff]
    %v388 = vld [vmem:[#allocation7 + $0x28] sm:$0xff]
    %v389 = vld [vmem:[#allocation7 + $0x30] sm:$0xff]
    %v390 = vld [vmem:[#allocation7 + $0x38] sm:$0xff]
    %v391 = vld [vmem:[#allocation7 + $0x40] sm:$0xff]
    %v392 = vld [vmem:[#allocation7 + $0x48] sm:$0xff]
    %v393 = vld [vmem:[#allocation7 + $0x50] sm:$0xff]
    %v394 = vld [vmem:[#allocation7 + $0x58] sm:$0xff]
    %v395 = vld [vmem:[#allocation7 + $0x60] sm:$0xff]
    %v396 = vld [vmem:[#allocation7 + $0x68] sm:$0xff]
    %v397 = vld [vmem:[#allocation7 + $0x70] sm:$0xff]
    %v398 = vld [vmem:[#allocation7 + $0x78] sm:$0xff]
    %v399 = vld [vmem:[%s4] sm:$0x1]
    %v401 = vlaneseq
    %v402 = vshrl.u32 %v401, 7
    %v403 = vsub.s32 0, %v402
    %v404 = vrot.slane %v399, %v403
    %406 = vmatprep.subr.mxu0 0.0
    %407 = vmatpush1.msra.mxu0 %v398
    %408 = vmatprep.subr.mxu0 0.0
    %409 = vmatpush1.msra.mxu0 %v397
    %410 = vmatprep.subr.mxu0 0.0
    %411 = vmatpush1.msra.mxu0 %v396
    %412 = vmatprep.subr.mxu0 0.0
    %413 = vmatpush1.msra.mxu0 %v395
    %414 = vmatprep.subr.mxu0 0.0
    %415 = vmatpush1.msra.mxu0 %v394
    %416 = vmatprep.subr.mxu0 0.0
    %417 = vmatpush1.msra.mxu0 %v393
    %418 = vmatprep.subr.mxu0 0.0
    %419 = vmatpush1.msra.mxu0 %v392
    %420 = vmatprep.subr.mxu0 0.0
    %421 = vmatpush1.msra.mxu0 %v391
    %422 = vmatprep.subr.mxu0 0.0
    %423 = vmatpush1.msra.mxu0 %v390
    %424 = vmatprep.subr.mxu0 0.0
    %425 = vmatpush1.msra.mxu0 %v389
    %426 = vmatprep.subr.mxu0 0.0
    %427 = vmatpush1.msra.mxu0 %v388
    %428 = vmatprep.subr.mxu0 0.0
    %429 = vmatpush1.msra.mxu0 %v387
    %430 = vmatprep.subr.mxu0 0.0
    %431 = vmatpush1.msra.mxu0 %v386
    %432 = vmatprep.subr.mxu0 0.0
    %433 = vmatpush1.msra.mxu0 %v385
    %434 = vmatprep.subr.mxu0 0.0
    %435 = vmatpush1.msra.mxu0 %v384
    %436 = vmatprep.subr.mxu0 0.0
    %437 = vmatpush1.msra.mxu0 %v383
    %438 = vmatprep.subr.mxu0 0.0
    %439 = vmatpush2.msra.mxu0 0.0
    %440 = vmatprep.subr.mxu0 0.0
    %441 = vmatpush2.msra.mxu0 0.0
    %442 = vmatprep.subr.mxu0 0.0
    %443 = vmatpush2.msra.mxu0 0.0
    %444 = vmatprep.subr.mxu0 0.0
    %445 = vmatpush2.msra.mxu0 0.0
    %446 = vmatprep.subr.mxu0 0.0
    %447 = vmatpush2.msra.mxu0 0.0
    %448 = vmatprep.subr.mxu0 0.0
    %449 = vmatpush2.msra.mxu0 0.0
    %450 = vmatprep.subr.mxu0 0.0
    %451 = vmatpush2.msra.mxu0 0.0
    %452 = vmatprep.subr.mxu0 0.0
    %453 = vmatpush2.msra.mxu0 0.0
    %454 = vmatprep.subr.mxu0 0.0
    %455 = vmatpush2.msra.mxu0 0.0
    %456 = vmatprep.subr.mxu0 0.0
    %457 = vmatpush2.msra.mxu0 0.0
    %458 = vmatprep.subr.mxu0 0.0
    %459 = vmatpush2.msra.mxu0 0.0
    %460 = vmatprep.subr.mxu0 0.0
    %461 = vmatpush2.msra.mxu0 0.0
    %462 = vmatprep.subr.mxu0 0.0
    %463 = vmatpush2.msra.mxu0 0.0
    %464 = vmatprep.subr.mxu0 0.0
    %465 = vmatpush2.msra.mxu0 0.0
    %466 = vmatprep.subr.mxu0 0.0
    %467 = vmatpush2.msra.mxu0 0.0
    %468 = vmatprep.subr.mxu0 0.0
    %469 = vmatpush2.msra.mxu0 0.0
    %470 = vmatprep.mubr.f32.mxu0 0.0
    %471 = vmatmul.mubr.f32.gmra.mxu0 %v375
    %v472 = vpop.f32.mrf.mxu0
    %v473 = vadd.f32 %v404, %v472
    %v474 = vpop.f32.mrf.mxu0
    %475 = vmatprep.mubr.f32.mxu0 0.0
    %476 = vmatmul.mubr.f32.gmra.mxu0 %v380
    %v477 = vpop.f32.mrf.mxu0
    %v478 = vadd.f32 %v404, %v477
    %v479 = vpop.f32.mrf.mxu0
    %480 = vdwg.mxu0
    %v481 = vmul.f32 %v473, 0.5
    %v482 = vmul.f32 %v478, 0.5
    %v483 = vmul.f32 %v473, 0.70710677
    %v484 = vmul.f32 %v478, 0.70710677
    %v485 = verf.f32.pop %v483
    %v486 = verf.f32.pop %v484
    %v487 = vadd.f32 %v485, 1.0
    %v488 = vadd.f32 %v486, 1.0
    %v489 = vmul.f32 %v481, %v487
    %v490 = vmul.f32 %v482, %v488
    %v491 = vld [vmem:[#allocation8] sm:$0xff]
    %v492 = vld [vmem:[#allocation8 + $0x8] sm:$0xff]
    %v493 = vld [vmem:[#allocation8 + $0x10] sm:$0xff]
    %v494 = vld [vmem:[#allocation8 + $0x18] sm:$0xff]
    %v495 = vld [vmem:[#allocation8 + $0x20] sm:$0xff]
    %v496 = vld [vmem:[#allocation8 + $0x28] sm:$0xff]
    %v497 = vld [vmem:[#allocation8 + $0x30] sm:$0xff]
    %v498 = vld [vmem:[#allocation8 + $0x38] sm:$0xff]
    %v499 = vld [vmem:[#allocation8 + $0x40] sm:$0xff]
    %v500 = vld [vmem:[#allocation8 + $0x48] sm:$0xff]
    %v501 = vld [vmem:[#allocation8 + $0x50] sm:$0xff]
    %v502 = vld [vmem:[#allocation8 + $0x58] sm:$0xff]
    %v503 = vld [vmem:[#allocation8 + $0x60] sm:$0xff]
    %v504 = vld [vmem:[#allocation8 + $0x68] sm:$0xff]
    %v505 = vld [vmem:[#allocation8 + $0x70] sm:$0xff]
    %v506 = vld [vmem:[#allocation8 + $0x78] sm:$0xff]
    %v507 = vld [vmem:[%s6] sm:$0x1]
    %v509 = vlaneseq
    %v510 = vshrl.u32 %v509, 7
    %v511 = vsub.s32 0, %v510
    %v512 = vrot.slane %v507, %v511
    %514 = vmatprep.subr.mxu0 0.0
    %515 = vmatpush1.msra.mxu0 %v506
    %516 = vmatprep.subr.mxu0 0.0
    %517 = vmatpush1.msra.mxu0 %v505
    %518 = vmatprep.subr.mxu0 0.0
    %519 = vmatpush1.msra.mxu0 %v504
    %520 = vmatprep.subr.mxu0 0.0
    %521 = vmatpush1.msra.mxu0 %v503
    %522 = vmatprep.subr.mxu0 0.0
    %523 = vmatpush1.msra.mxu0 %v502
    %524 = vmatprep.subr.mxu0 0.0
    %525 = vmatpush1.msra.mxu0 %v501
    %526 = vmatprep.subr.mxu0 0.0
    %527 = vmatpush1.msra.mxu0 %v500
    %528 = vmatprep.subr.mxu0 0.0
    %529 = vmatpush1.msra.mxu0 %v499
    %530 = vmatprep.subr.mxu0 0.0
    %531 = vmatpush1.msra.mxu0 %v498
    %532 = vmatprep.subr.mxu0 0.0
    %533 = vmatpush1.msra.mxu0 %v497
    %534 = vmatprep.subr.mxu0 0.0
    %535 = vmatpush1.msra.mxu0 %v496
    %536 = vmatprep.subr.mxu0 0.0
    %537 = vmatpush1.msra.mxu0 %v495
    %538 = vmatprep.subr.mxu0 0.0
    %539 = vmatpush1.msra.mxu0 %v494
    %540 = vmatprep.subr.mxu0 0.0
    %541 = vmatpush1.msra.mxu0 %v493
    %542 = vmatprep.subr.mxu0 0.0
    %543 = vmatpush1.msra.mxu0 %v492
    %544 = vmatprep.subr.mxu0 0.0
    %545 = vmatpush1.msra.mxu0 %v491
    %546 = vmatprep.subr.mxu0 0.0
    %547 = vmatpush2.msra.mxu0 0.0
    %548 = vmatprep.subr.mxu0 0.0
    %549 = vmatpush2.msra.mxu0 0.0
    %550 = vmatprep.subr.mxu0 0.0
    %551 = vmatpush2.msra.mxu0 0.0
    %552 = vmatprep.subr.mxu0 0.0
    %553 = vmatpush2.msra.mxu0 0.0
    %554 = vmatprep.subr.mxu0 0.0
    %555 = vmatpush2.msra.mxu0 0.0
    %556 = vmatprep.subr.mxu0 0.0
    %557 = vmatpush2.msra.mxu0 0.0
    %558 = vmatprep.subr.mxu0 0.0
    %559 = vmatpush2.msra.mxu0 0.0
    %560 = vmatprep.subr.mxu0 0.0
    %561 = vmatpush2.msra.mxu0 0.0
    %562 = vmatprep.subr.mxu0 0.0
    %563 = vmatpush2.msra.mxu0 0.0
    %564 = vmatprep.subr.mxu0 0.0
    %565 = vmatpush2.msra.mxu0 0.0
    %566 = vmatprep.subr.mxu0 0.0
    %567 = vmatpush2.msra.mxu0 0.0
    %568 = vmatprep.subr.mxu0 0.0
    %569 = vmatpush2.msra.mxu0 0.0
    %570 = vmatprep.subr.mxu0 0.0
    %571 = vmatpush2.msra.mxu0 0.0
    %572 = vmatprep.subr.mxu0 0.0
    %573 = vmatpush2.msra.mxu0 0.0
    %574 = vmatprep.subr.mxu0 0.0
    %575 = vmatpush2.msra.mxu0 0.0
    %576 = vmatprep.subr.mxu0 0.0
    %577 = vmatpush2.msra.mxu0 0.0
    %578 = vmatprep.mubr.f32.mxu0 0.0
    %579 = vmatmul.mubr.f32.gmra.mxu0 %v489
    %v580 = vpop.f32.mrf.mxu0
    %v581 = vadd.f32 %v512, %v580
    %v582 = vpop.f32.mrf.mxu0
    %583 = vmatprep.mubr.f32.mxu0 0.0
    %584 = vmatmul.mubr.f32.gmra.mxu0 %v490
    %v585 = vpop.f32.mrf.mxu0
    %v586 = vadd.f32 %v512, %v585
    %v587 = vpop.f32.mrf.mxu0
    %588 = vdwg.mxu0
    %589 = vmax.xlane.f32.xlu0 %v581
    %v590 = vpop.xlane.xlu0 %589
    %591 = vmax.xlane.f32.xlu0 %v586
    %v592 = vpop.xlane.xlu0 %591
    %v593 = vsub.f32 %v581, %v590
    %v594 = vsub.f32 %v586, %v592
    %v595 = vmul.f32 %v593, 1.442695
    %v596 = vpow.pop %v595
    %v597 = vmul.f32 %v594, 1.442695
    %v598 = vpow.pop %v597
    %599 = vadd.xlane.f32.xlu0 %v596
    %v600 = vpop.xlane.xlu0 %599
    %601 = vadd.xlane.f32.xlu0 %v598
    %v602 = vpop.xlane.xlu0 %601
    %v603 = vrcp.pop %v600
    %v604 = vmul.f32 %v596, %v603
    %v605 = vrcp.pop %v602
    %v606 = vmul.f32 %v598, %v605
    %607 = vst [vmem:[#allocation10] sm:$0xff] %v604
    %608 = vst [vmem:[#allocation10 + $0x8] sm:$0xff] %v606
    // Predicated region
    $region46: #{tpu_custom_call.1} parent=1 // pred_check
      _
    $region47: #{tpu_custom_call.1} parent=1 // pred_check_branch
      %610 = sbr.rel (0) target = $region49
    $region48: #{tpu_custom_call.1} parent=1 // pred_region
      %s612 = ssub.s32 256, 256
      %613 = vsyncadd [#allocation4], %s612
      %s614 = sshll.u32 [#allocation10], 4
      %s615 = int_to_ptr.vmem [resolvable:$true] %s614
      %620 = dma.vmem_to_hbm [thread:$0]  %s615, 256, %s7, [#allocation4], 128, 128, 8
    $region49: #{tpu_custom_call.1} parent=1 // pred_fallthru
      _
    // Predicated region
    $region50: #{tpu_custom_call.1} parent=1 // pred_check
      _
    $region51: #{tpu_custom_call.1} parent=1 // pred_check_branch
      %622 = sbr.rel (0) target = $region53
    $region52: #{tpu_custom_call.1} parent=1 // pred_region
      %623 = dma.done [#allocation4], 256
    $region53: #{tpu_custom_call.1} parent=1 // pred_fallthru
      _
    %624 = vsyncpa [#allocation3], 1
    %625 = vsyncpa [#allocation6], 1
    %626 = vsyncpa [#allocation9], 1
    %627 = vsyncpa [#allocation4], 1

</llo_original>
